<compile_context>
chip_gen: v7x
topology: tpu7x:2x2x1
jax: 0.10.0
libtpu: 0.0.40
codegen_flags: <defaults>
</compile_context>

<pallas_src>
import jax
import jax.numpy as jnp
from jax.experimental import pallas as pl
from jax.experimental.pallas import tpu as pltpu


def _round_up(n, m):
    return ((n + m - 1) // m) * m


def _ffn_kernel(x_ref, lng_ref, lnb_ref, w1_ref, b1_ref, w2_ref, b2_ref, o_ref):
    # x_ref block: (tile_rows, C) f32
    x = x_ref[...].astype(jnp.float32)

    # LayerNorm (eps = 1e-5, matching torch.nn.LayerNorm defaults).
    mu = jnp.mean(x, axis=-1, keepdims=True)
    xc = x - mu
    var = jnp.mean(xc * xc, axis=-1, keepdims=True)
    h = xc * jax.lax.rsqrt(var + 1e-5) * lng_ref[...] + lnb_ref[...]

    # w_1: bf16 operands, f32 accumulation on the MXU, then SiLU (EUP sigmoid).
    h1 = jnp.dot(h.astype(jnp.bfloat16), w1_ref[...],
                 preferred_element_type=jnp.float32) + b1_ref[...]
    h1 = h1 * jax.nn.sigmoid(h1)

    # TODO(synk): dropout1 / dropout2 are identity in eval mode (no RNG dropout).
    y = jnp.dot(h1.astype(jnp.bfloat16), w2_ref[...],
                preferred_element_type=jnp.float32) + b2_ref[...]

    o_ref[...] = y.astype(o_ref.dtype)


def feed_forward_module(x_tbc, params, *, tile_rows=128):
    """Eval-mode forward of FeedForwardModule.  x_tbc: (T, B, C) f32 -> (T, B, C) f32."""
    T, B, C = x_tbc.shape
    N = T * B
    # Flatten (T, B) into one row axis: free reshape, no transpose.
    x2d = x_tbc.reshape(N, C)

    tm = min(tile_rows, _round_up(N, 8))          # rows per grid step (multiple of 8)
    n_pad = _round_up(N, tm)
    if n_pad != N:
        x2d = jnp.pad(x2d, ((0, n_pad - N), (0, 0)))
    grid = (n_pad // tm,)

    lng = params["ln_g"]
    lnb = params["ln_b"]
    w1 = params["w1"].astype(jnp.bfloat16)        # bf16 weights: MXU-native, half DMA bytes
    b1 = params["b1"]
    w2 = params["w2"].astype(jnp.bfloat16)
    b2 = params["b2"]

    row_spec = pl.BlockSpec((tm, C), lambda i: (i, 0))

    # Constant index maps -> each parameter is fetched into VMEM once and
    # reused across every grid step.
    def const_spec(w):
        return pl.BlockSpec(w.shape, lambda i: (0, 0))

    out2d = pl.pallas_call(
        _ffn_kernel,
        grid=grid,
        in_specs=[row_spec,
                  const_spec(lng), const_spec(lnb),
                  const_spec(w1), const_spec(b1),
                  const_spec(w2), const_spec(b2)],
        out_specs=row_spec,
        out_shape=jax.ShapeDtypeStruct((n_pad, C), jnp.float32),
        compiler_params=pltpu.CompilerParams(
            dimension_semantics=("parallel",),
            vmem_limit_bytes=32 * 1024 * 1024),
    )(x2d, lng, lnb, w1, b1, w2, b2)

    return out2d[:N].reshape(T, B, C)


def init_params(key, C, H):
    ks = jax.random.split(key, 6)

    def nrm(k, shape, s=0.1):
        return s * jax.random.normal(k, shape, dtype=jnp.float32)

    return {
        "ln_g": 1.0 + nrm(ks[0], (1, C)),
        "ln_b": nrm(ks[1], (1, C)),
        "w1": nrm(ks[2], (C, H)),      # Linear weight pre-transposed to (in, out)
        "b1": nrm(ks[3], (1, H)),
        "w2": nrm(ks[4], (H, C)),
        "b2": nrm(ks[5], (1, C)),
    }


def reference(x_tbc, p):
    """Pure-JAX f32 reference of the eval-mode forward pass."""
    mu = jnp.mean(x_tbc, -1, keepdims=True)
    var = jnp.mean((x_tbc - mu) ** 2, -1, keepdims=True)
    h = (x_tbc - mu) / jnp.sqrt(var + 1e-5) * p["ln_g"][0] + p["ln_b"][0]
    h = h @ p["w1"] + p["b1"][0]
    h = h * jax.nn.sigmoid(h)          # SiLU ('swish')
    return h @ p["w2"] + p["b2"][0]


if __name__ == "__main__":
    # Small but TPU-friendly shapes: lane-dense C, H (multiples of 128);
    # T*B = 256 rows -> two 128-row tiles on the "parallel" grid axis.
    T, B = 64, 4          # seq, batch
    C, H = 128, 512       # input_feat, hidden_units

    key = jax.random.PRNGKey(0)
    kx, kp = jax.random.split(key)
    x = jax.random.normal(kx, (T, B, C), dtype=jnp.float32)
    params = init_params(kp, C, H)

    out = feed_forward_module(x, params)
    jax.block_until_ready(out)

    ref = reference(x, params)
    assert out.shape == (T, B, C)
    # bf16 matmul operands with f32 accumulation vs full-f32 reference.
    assert jnp.allclose(out, ref, atol=3e-2, rtol=3e-2), \
        float(jnp.max(jnp.abs(out - ref)))

    print("KERNEL_OK")
</pallas_src>

<mosaic_0001>
module attributes {stable_mosaic.version = 11 : i64} {
  func.func @_ffn_kernel(%arg0: i32, %arg1: memref<128x128xf32, #tpu.memory_space<vmem>>, %arg2: memref<1x128xf32, #tpu.memory_space<vmem>>, %arg3: memref<1x128xf32, #tpu.memory_space<vmem>>, %arg4: memref<128x512xbf16, #tpu.memory_space<vmem>>, %arg5: memref<1x512xf32, #tpu.memory_space<vmem>>, %arg6: memref<512x128xbf16, #tpu.memory_space<vmem>>, %arg7: memref<1x128xf32, #tpu.memory_space<vmem>>, %arg8: memref<128x128xf32, #tpu.memory_space<vmem>>) attributes {dimension_semantics = [#tpu.dimension_semantics<parallel>], iteration_bounds = array<i64: 2>, scalar_prefetch = 0 : i64, scratch_operands = 0 : i64, tpu.core_type = #tpu.core_type<tc>, window_params = [{transform_indices = @transform_0, window_bounds = array<i64: 128, 128>}, {pipeline_mode = #tpu.pipeline_mode<synchronous>, transform_indices = @transform_1, window_bounds = array<i64: 1, 128>}, {pipeline_mode = #tpu.pipeline_mode<synchronous>, transform_indices = @transform_2, window_bounds = array<i64: 1, 128>}, {pipeline_mode = #tpu.pipeline_mode<synchronous>, transform_indices = @transform_3, window_bounds = array<i64: 128, 512>}, {pipeline_mode = #tpu.pipeline_mode<synchronous>, transform_indices = @transform_4, window_bounds = array<i64: 1, 512>}, {pipeline_mode = #tpu.pipeline_mode<synchronous>, transform_indices = @transform_5, window_bounds = array<i64: 512, 128>}, {pipeline_mode = #tpu.pipeline_mode<synchronous>, transform_indices = @transform_6, window_bounds = array<i64: 1, 128>}, {transform_indices = @transform_7, window_bounds = array<i64: 128, 128>}]} {
    %c0 = arith.constant 0 : index
    %c0_0 = arith.constant 0 : index
    %0 = vector.load %arg1[%c0, %c0_0] : memref<128x128xf32, #tpu.memory_space<vmem>>, vector<128x128xf32>
    %cst = arith.constant dense<0.000000e+00> : vector<128xf32>
    %1 = vector.multi_reduction <add>, %0, %cst [1] : vector<128x128xf32> to vector<128xf32>
    %2 = vector.shape_cast %1 : vector<128xf32> to vector<128x1xf32>
    %cst_1 = arith.constant 1.280000e+02 : f32
    %3 = vector.broadcast %cst_1 : f32 to vector<128x1xf32>
    %4 = arith.divf %2, %3 : vector<128x1xf32>
    %5 = vector.broadcast %4 : vector<128x1xf32> to vector<128x128xf32>
    %6 = arith.subf %0, %5 : vector<128x128xf32>
    %7 = arith.mulf %6, %6 : vector<128x128xf32>
    %cst_2 = arith.constant dense<0.000000e+00> : vector<128xf32>
    %8 = vector.multi_reduction <add>, %7, %cst_2 [1] : vector<128x128xf32> to vector<128xf32>
    %9 = vector.shape_cast %8 : vector<128xf32> to vector<128x1xf32>
    %cst_3 = arith.constant 1.280000e+02 : f32
    %10 = vector.broadcast %cst_3 : f32 to vector<128x1xf32>
    %11 = arith.divf %9, %10 : vector<128x1xf32>
    %cst_4 = arith.constant 9.99999974E-6 : f32
    %12 = vector.broadcast %cst_4 : f32 to vector<128x1xf32>
    %13 = arith.addf %11, %12 : vector<128x1xf32>
    %14 = math.rsqrt %13 : vector<128x1xf32>
    %15 = vector.broadcast %14 : vector<128x1xf32> to vector<128x128xf32>
    %16 = arith.mulf %6, %15 : vector<128x128xf32>
    %c0_5 = arith.constant 0 : index
    %c0_6 = arith.constant 0 : index
    %17 = vector.load %arg2[%c0_5, %c0_6] : memref<1x128xf32, #tpu.memory_space<vmem>>, vector<1x128xf32>
    %18 = vector.broadcast %17 : vector<1x128xf32> to vector<128x128xf32>
    %19 = arith.mulf %16, %18 : vector<128x128xf32>
    %c0_7 = arith.constant 0 : index
    %c0_8 = arith.constant 0 : index
    %20 = vector.load %arg3[%c0_7, %c0_8] : memref<1x128xf32, #tpu.memory_space<vmem>>, vector<1x128xf32>
    %21 = vector.broadcast %20 : vector<1x128xf32> to vector<128x128xf32>
    %22 = arith.addf %19, %21 : vector<128x128xf32>
    %23 = arith.truncf %22 : vector<128x128xf32> to vector<128x128xbf16>
    %c0_9 = arith.constant 0 : index
    %c0_10 = arith.constant 0 : index
    %24 = vector.load %arg4[%c0_9, %c0_10] : memref<128x512xbf16, #tpu.memory_space<vmem>>, vector<128x512xbf16>
    %cst_11 = arith.constant dense<0.000000e+00> : vector<128x512xf32>
    %25 = tpu.matmul %23, %24, %cst_11 {dimension_numbers = #tpu.dot_dimension_numbers<[1], [0], [0], [1], [0, 0, 1, 1], [], []>} : vector<128x128xbf16>, vector<128x512xbf16>, vector<128x512xf32> -> vector<128x512xf32>
    %c0_12 = arith.constant 0 : index
    %c0_13 = arith.constant 0 : index
    %26 = vector.load %arg5[%c0_12, %c0_13] : memref<1x512xf32, #tpu.memory_space<vmem>>, vector<1x512xf32>
    %27 = vector.broadcast %26 : vector<1x512xf32> to vector<128x512xf32>
    %28 = arith.addf %25, %27 : vector<128x512xf32>
    %29 = arith.negf %28 : vector<128x512xf32>
    %30 = math.exp %29 : vector<128x512xf32>
    %cst_14 = arith.constant 1.000000e+00 : f32
    %31 = vector.broadcast %cst_14 : f32 to vector<128x512xf32>
    %32 = arith.addf %31, %30 : vector<128x512xf32>
    %33 = arith.divf %31, %32 : vector<128x512xf32>
    %34 = arith.mulf %28, %33 : vector<128x512xf32>
    %35 = arith.truncf %34 : vector<128x512xf32> to vector<128x512xbf16>
    %c0_15 = arith.constant 0 : index
    %c0_16 = arith.constant 0 : index
    %36 = vector.load %arg6[%c0_15, %c0_16] : memref<512x128xbf16, #tpu.memory_space<vmem>>, vector<512x128xbf16>
    %cst_17 = arith.constant dense<0.000000e+00> : vector<128x128xf32>
    %37 = tpu.matmul %35, %36, %cst_17 {dimension_numbers = #tpu.dot_dimension_numbers<[1], [0], [0], [1], [0, 0, 1, 1], [], []>} : vector<128x512xbf16>, vector<512x128xbf16>, vector<128x128xf32> -> vector<128x128xf32>
    %c0_18 = arith.constant 0 : index
    %c0_19 = arith.constant 0 : index
    %38 = vector.load %arg7[%c0_18, %c0_19] : memref<1x128xf32, #tpu.memory_space<vmem>>, vector<1x128xf32>
    %39 = vector.broadcast %38 : vector<1x128xf32> to vector<128x128xf32>
    %40 = arith.addf %37, %39 : vector<128x128xf32>
    %c0_20 = arith.constant 0 : index
    %c0_21 = arith.constant 0 : index
    %41 = vector.load %arg8[%c0_20, %c0_21] : memref<128x128xf32, #tpu.memory_space<vmem>>, vector<128x128xf32>
    tpu.vector_store %arg8[%c0_20, %c0_21], %40 {strides = array<i32>} : memref<128x128xf32, #tpu.memory_space<vmem>>, vector<128x128xf32>,
    return
  }
  func.func @transform_0(%arg0: i32) -> (i32, i32) {
    %c0_i32 = arith.constant 0 : i32
    %c0_i32_0 = arith.constant 0 : i32
    return %arg0, %c0_i32 : i32, i32
  }
  func.func @transform_1(%arg0: i32) -> (i32, i32) {
    %c0_i32 = arith.constant 0 : i32
    %c0_i32_0 = arith.constant 0 : i32
    %c0_i32_1 = arith.constant 0 : i32
    return %c0_i32, %c0_i32_0 : i32, i32
  }
  func.func @transform_2(%arg0: i32) -> (i32, i32) {
    %c0_i32 = arith.constant 0 : i32
    %c0_i32_0 = arith.constant 0 : i32
    %c0_i32_1 = arith.constant 0 : i32
    return %c0_i32, %c0_i32_0 : i32, i32
  }
  func.func @transform_3(%arg0: i32) -> (i32, i32) {
    %c0_i32 = arith.constant 0 : i32
    %c0_i32_0 = arith.constant 0 : i32
    %c0_i32_1 = arith.constant 0 : i32
    return %c0_i32, %c0_i32_0 : i32, i32
  }
  func.func @transform_4(%arg0: i32) -> (i32, i32) {
    %c0_i32 = arith.constant 0 : i32
    %c0_i32_0 = arith.constant 0 : i32
    %c0_i32_1 = arith.constant 0 : i32
    return %c0_i32, %c0_i32_0 : i32, i32
  }
  func.func @transform_5(%arg0: i32) -> (i32, i32) {
    %c0_i32 = arith.constant 0 : i32
    %c0_i32_0 = arith.constant 0 : i32
    %c0_i32_1 = arith.constant 0 : i32
    return %c0_i32, %c0_i32_0 : i32, i32
  }
  func.func @transform_6(%arg0: i32) -> (i32, i32) {
    %c0_i32 = arith.constant 0 : i32
    %c0_i32_0 = arith.constant 0 : i32
    %c0_i32_1 = arith.constant 0 : i32
    return %c0_i32, %c0_i32_0 : i32, i32
  }
  func.func @transform_7(%arg0: i32) -> (i32, i32) {
    %c0_i32 = arith.constant 0 : i32
    %c0_i32_0 = arith.constant 0 : i32
    return %arg0, %c0_i32 : i32, i32
  }
}

</mosaic_0001>

<llo_original>
// kernel: tpu_custom_call.1
$region0: #{tpu_custom_call.1}
  #allocation0 [shape = 'u32[]', space=smem, size = 0x4, offset = 0x4, fixed_abs, tag = 'smem constant byte address 0x4 - core index']
  #allocation1 [shape = 'u32[144,128]{1,0:T(1,128)}', space=vmem, size = 0x12000, scoped, tag = 'internal scratch']
  %s0 = inlined_call_operand.hbm [shape: f32[256,128], index: 0, kind: input, shape index: {}]
  %s1 = inlined_call_operand.vmem [shape: f32[1,128], index: 1, kind: input, shape index: {}]
  %s2 = inlined_call_operand.vmem [shape: f32[1,128], index: 2, kind: input, shape index: {}]
  %s3 = inlined_call_operand.hbm [shape: bf16[128,512], index: 3, kind: input, shape index: {}]
  %s4 = inlined_call_operand.vmem [shape: f32[1,512], index: 4, kind: input, shape index: {}]
  %s5 = inlined_call_operand.hbm [shape: bf16[512,128], index: 5, kind: input, shape index: {}]
  %s6 = inlined_call_operand.vmem [shape: f32[1,128], index: 6, kind: input, shape index: {}]
  %s7 = inlined_call_operand.hbm [shape: f32[256,128], index: 7, kind: output, shape index: {}]
  %s8 = sld [smem:[#allocation0]]
  $region73: #{tpu_custom_call.1} parent=0
    _
  %s10 = ssub.s32 1, %s8
  %s11 = scalar_select 0, %s10, %s8
  $region1: #{tpu_custom_call.1} parent=0
    #allocation2 [shape = 'u8[131072]{0}', space=vmem, size = 0x20000, scoped, tag = 'input window, operand 0']
    #allocation3 [shape = 's32[2]{0}', space=sflag, size = 0x8, scoped, tag = 'scoped memory for tpu_custom_call.1']
    #allocation4 [shape = 's32[2]{0}', space=sflag, size = 0x8, scoped, tag = 'scoped memory for tpu_custom_call.1']
    #allocation5 [shape = 'u8[131072]{0}', space=vmem, size = 0x20000, scoped, tag = 'input window, operand 3, single buffered']
    #allocation6 [shape = 's32[1]{0}', space=sflag, size = 0x4, scoped, tag = 'scoped memory for tpu_custom_call.1']
    #allocation7 [shape = 'u8[131072]{0}', space=vmem, size = 0x20000, scoped, tag = 'input window, operand 5, single buffered']
    #allocation8 [shape = 'u8[131072]{0}', space=vmem, size = 0x20000, scoped, tag = 'output window, operand 0']
    %12 = vsyncpa [#allocation3], 0
    %s13 = scalar_lea.sflag [#allocation3], 1
    %14 = vsyncpa %s13, 0
    %15 = vsyncpa [#allocation6], 0
    %16 = vsyncpa [#allocation4], 0
    %s17 = scalar_lea.sflag [#allocation4], 1
    %18 = vsyncpa %s17, 0
    loop: start=0, step=1, limit=4
    $region2: #{tpu_custom_call.1} parent=1 // loop_pre_header
      _
    $region3: #{tpu_custom_call.1} parent=1 // loop_header
      %s20 = sphi 0, %s24
      %p21 = scmp.ge.s32.totalorder %s20, 4
      %s30 = sphi 0, %s32
      %s33 = sphi 0, %s30
      %s34 = sphi 0, %s33
      %s50 = sphi 0, %s34
      %s54 = sphi 0, %s54
      %s56 = sphi 0, %s54
      %s57 = sphi 0, %s56
      %s71 = sphi 0, %s57
      %s75 = sphi 0, %s75
      %s77 = sphi 0, %s75
      %s78 = sphi 0, %s77
      %s92 = sphi 0, %s78
      %s96 = sphi 0, %s96
      %s98 = sphi 0, %s96
      %s99 = sphi 0, %s98
      %s113 = sphi 0, %s99
      %s117 = sphi 0, %s117
      %s119 = sphi 0, %s117
      %s120 = sphi 0, %s119
      %s134 = sphi 0, %s120
      %s138 = sphi 0, %s138
      %s140 = sphi 0, %s138
      %s141 = sphi 0, %s140
      %s155 = sphi 0, %s141
      %s159 = sphi 0, %s159
      %s161 = sphi 0, %s159
      %s162 = sphi 0, %s161
      %s176 = sphi 0, %s162
      %s182 = sphi 0, %s184
      %s185 = sphi 0, %s182
      %s186 = sphi 0, %s185
      %s202 = sphi 0, %s186
    $region4: #{tpu_custom_call.1} parent=1 // loop_header_branch
      %23 = sbr.rel (%p21) target = $region8
    $region5: #{tpu_custom_call.1} parent=1 // loop_body
      %s25 = ssub.s32 %s20, 1
      %s26 = ssub.s32 %s20, 2
      %s27 = sadd.s32 %s20, 1
      %s28 = ssub.s32 %s20, %s27
      %p29 = scmp.eq.s32.totalorder %s28, 0
      %s31 = sadd.s32 %s30, 1
      %s32 = scalar_select %p29, %s30, %s31
      %p35 = pneg %p29
      %p36 = scmp.eq.s32.totalorder %s20, 1
      %p37 = por %p35, %p36
      %p38 = scmp.ne.s32.totalorder %s30, %s33
      %p39 = scmp.eq.s32.totalorder %s20, 0
      %p40 = por %p38, %p39
      %p41 = scmp.ne.s32.totalorder %s30, %s33
      %p42 = scmp.eq.s32.totalorder %s25, 1
      %p43 = por %p41, %p42
      %p44 = scmp.ne.s32.totalorder %s33, %s34
      %p45 = scmp.eq.s32.totalorder %s25, 0
      %p46 = por %p44, %p45
      %p47 = scmp.ne.s32.totalorder %s33, %s34
      %p48 = scmp.eq.s32.totalorder %s26, 1
      %p49 = por %p47, %p48
      %p51 = scmp.ne.s32.totalorder %s34, %s50
      %p52 = scmp.eq.s32.totalorder %s26, 0
      %p53 = por %p51, %p52
      %s55 = sadd.s32 %s54, 1
      %p58 = scmp.eq.s32.totalorder %s20, 1
      %p59 = scmp.ne.s32.totalorder %s54, %s56
      %p60 = scmp.eq.s32.totalorder %s20, 0
      %p61 = por %p59, %p60
      %p62 = scmp.ne.s32.totalorder %s54, %s56
      %p63 = scmp.eq.s32.totalorder %s25, 1
      %p64 = por %p62, %p63
      %p65 = scmp.ne.s32.totalorder %s56, %s57
      %p66 = scmp.eq.s32.totalorder %s25, 0
      %p67 = por %p65, %p66
      %p68 = scmp.ne.s32.totalorder %s56, %s57
      %p69 = scmp.eq.s32.totalorder %s26, 1
      %p70 = por %p68, %p69
      %p72 = scmp.ne.s32.totalorder %s57, %s71
      %p73 = scmp.eq.s32.totalorder %s26, 0
      %p74 = por %p72, %p73
      %s76 = sadd.s32 %s75, 1
      %p79 = scmp.eq.s32.totalorder %s20, 1
      %p80 = scmp.ne.s32.totalorder %s75, %s77
      %p81 = scmp.eq.s32.totalorder %s20, 0
      %p82 = por %p80, %p81
      %p83 = scmp.ne.s32.totalorder %s75, %s77
      %p84 = scmp.eq.s32.totalorder %s25, 1
      %p85 = por %p83, %p84
      %p86 = scmp.ne.s32.totalorder %s77, %s78
      %p87 = scmp.eq.s32.totalorder %s25, 0
      %p88 = por %p86, %p87
      %p89 = scmp.ne.s32.totalorder %s77, %s78
      %p90 = scmp.eq.s32.totalorder %s26, 1
      %p91 = por %p89, %p90
      %p93 = scmp.ne.s32.totalorder %s78, %s92
      %p94 = scmp.eq.s32.totalorder %s26, 0
      %p95 = por %p93, %p94
      %s97 = sadd.s32 %s96, 1
      %p100 = scmp.eq.s32.totalorder %s20, 1
      %p101 = scmp.ne.s32.totalorder %s96, %s98
      %p102 = scmp.eq.s32.totalorder %s20, 0
      %p103 = por %p101, %p102
      %p104 = scmp.ne.s32.totalorder %s96, %s98
      %p105 = scmp.eq.s32.totalorder %s25, 1
      %p106 = por %p104, %p105
      %p107 = scmp.ne.s32.totalorder %s98, %s99
      %p108 = scmp.eq.s32.totalorder %s25, 0
      %p109 = por %p107, %p108
      %p110 = scmp.ne.s32.totalorder %s98, %s99
      %p111 = scmp.eq.s32.totalorder %s26, 1
      %p112 = por %p110, %p111
      %p114 = scmp.ne.s32.totalorder %s99, %s113
      %p115 = scmp.eq.s32.totalorder %s26, 0
      %p116 = por %p114, %p115
      %s118 = sadd.s32 %s117, 1
      %p121 = scmp.eq.s32.totalorder %s20, 1
      %p122 = scmp.ne.s32.totalorder %s117, %s119
      %p123 = scmp.eq.s32.totalorder %s20, 0
      %p124 = por %p122, %p123
      %p125 = scmp.ne.s32.totalorder %s117, %s119
      %p126 = scmp.eq.s32.totalorder %s25, 1
      %p127 = por %p125, %p126
      %p128 = scmp.ne.s32.totalorder %s119, %s120
      %p129 = scmp.eq.s32.totalorder %s25, 0
      %p130 = por %p128, %p129
      %p131 = scmp.ne.s32.totalorder %s119, %s120
      %p132 = scmp.eq.s32.totalorder %s26, 1
      %p133 = por %p131, %p132
      %p135 = scmp.ne.s32.totalorder %s120, %s134
      %p136 = scmp.eq.s32.totalorder %s26, 0
      %p137 = por %p135, %p136
      %s139 = sadd.s32 %s138, 1
      %p142 = scmp.eq.s32.totalorder %s20, 1
      %p143 = scmp.ne.s32.totalorder %s138, %s140
      %p144 = scmp.eq.s32.totalorder %s20, 0
      %p145 = por %p143, %p144
      %p146 = scmp.ne.s32.totalorder %s138, %s140
      %p147 = scmp.eq.s32.totalorder %s25, 1
      %p148 = por %p146, %p147
      %p149 = scmp.ne.s32.totalorder %s140, %s141
      %p150 = scmp.eq.s32.totalorder %s25, 0
      %p151 = por %p149, %p150
      %p152 = scmp.ne.s32.totalorder %s140, %s141
      %p153 = scmp.eq.s32.totalorder %s26, 1
      %p154 = por %p152, %p153
      %p156 = scmp.ne.s32.totalorder %s141, %s155
      %p157 = scmp.eq.s32.totalorder %s26, 0
      %p158 = por %p156, %p157
      %s160 = sadd.s32 %s159, 1
      %p163 = scmp.eq.s32.totalorder %s20, 1
      %p164 = scmp.ne.s32.totalorder %s159, %s161
      %p165 = scmp.eq.s32.totalorder %s20, 0
      %p166 = por %p164, %p165
      %p167 = scmp.ne.s32.totalorder %s159, %s161
      %p168 = scmp.eq.s32.totalorder %s25, 1
      %p169 = por %p167, %p168
      %p170 = scmp.ne.s32.totalorder %s161, %s162
      %p171 = scmp.eq.s32.totalorder %s25, 0
      %p172 = por %p170, %p171
      %p173 = scmp.ne.s32.totalorder %s161, %s162
      %p174 = scmp.eq.s32.totalorder %s26, 1
      %p175 = por %p173, %p174
      %p177 = scmp.ne.s32.totalorder %s162, %s176
      %p178 = scmp.eq.s32.totalorder %s26, 0
      %p179 = por %p177, %p178
      %s180 = ssub.s32 %s20, %s27
      %p181 = scmp.eq.s32.totalorder %s180, 0
      %s183 = sadd.s32 %s182, 1
      %s184 = scalar_select %p181, %s182, %s183
      %p187 = pneg %p181
      %p188 = scmp.eq.s32.totalorder %s20, 1
      %p189 = por %p187, %p188
      %p190 = scmp.ne.s32.totalorder %s182, %s185
      %p191 = scmp.eq.s32.totalorder %s20, 0
      %p192 = por %p190, %p191
      %p193 = scmp.ne.s32.totalorder %s182, %s185
      %p194 = scmp.eq.s32.totalorder %s25, 1
      %p195 = por %p193, %p194
      %p196 = scmp.ne.s32.totalorder %s185, %s186
      %p197 = scmp.eq.s32.totalorder %s25, 0
      %p198 = por %p196, %p197
      %p199 = scmp.ne.s32.totalorder %s185, %s186
      %p200 = scmp.eq.s32.totalorder %s26, 1
      %p201 = por %p199, %p200
      %p203 = scmp.ne.s32.totalorder %s186, %s202
      %p204 = scmp.eq.s32.totalorder %s26, 0
      %p205 = por %p203, %p204
      %p206 = scmp.le.s32.totalorder 1, %s20
      %p207 = scmp.lt.s32.totalorder %s20, 3
      %p208 = pnand %p206, %p207
      %p209 = pneg %p208
      // Predicated region
      $region9: #{tpu_custom_call.1} parent=5 // pred_check
        _
      $region10: #{tpu_custom_call.1} parent=5 // pred_check_branch
        %211 = sbr.rel (%p208) target = $region12
      $region11: #{tpu_custom_call.1} parent=5 // pred_region
        %s212 = ssub.s32 %s20, 1
        // Predicated region
        $region13: #{tpu_custom_call.1} parent=11 // pred_check
          %p213 = pneg %p67
        $region14: #{tpu_custom_call.1} parent=11 // pred_check_branch
          %215 = sbr.rel (%p213) target = $region16
        $region15: #{tpu_custom_call.1} parent=11 // pred_region
          _
        $region16: #{tpu_custom_call.1} parent=11 // pred_fallthru
          _
        // Predicated region
        $region17: #{tpu_custom_call.1} parent=11 // pred_check
          %p216 = pneg %p88
        $region18: #{tpu_custom_call.1} parent=11 // pred_check_branch
          %218 = sbr.rel (%p216) target = $region20
        $region19: #{tpu_custom_call.1} parent=11 // pred_region
          _
        $region20: #{tpu_custom_call.1} parent=11 // pred_fallthru
          _
        // Predicated region
        $region21: #{tpu_custom_call.1} parent=11 // pred_check
          %p219 = pneg %p109
        $region22: #{tpu_custom_call.1} parent=11 // pred_check_branch
          %221 = sbr.rel (%p219) target = $region24
        $region23: #{tpu_custom_call.1} parent=11 // pred_region
          %s223 = ssub.s32 4096, 4096
          %224 = vsyncadd [#allocation6], %s223
          %s225 = sshll.u32 [#allocation5], 4
          %s226 = int_to_ptr.vmem [resolvable:$true] %s225
          %231 = dma.hbm_to_vmem [thread:$0]  %s3, 4096, %s226, [#allocation6], 256, 256, 16
        $region24: #{tpu_custom_call.1} parent=11 // pred_fallthru
          _
        // Predicated region
        $region25: #{tpu_custom_call.1} parent=11 // pred_check
          %p232 = pneg %p130
        $region26: #{tpu_custom_call.1} parent=11 // pred_check_branch
          %234 = sbr.rel (%p232) target = $region28
        $region27: #{tpu_custom_call.1} parent=11 // pred_region
          _
        $region28: #{tpu_custom_call.1} parent=11 // pred_fallthru
          _
        // Predicated region
        $region29: #{tpu_custom_call.1} parent=11 // pred_check
          %p235 = pneg %p151
        $region30: #{tpu_custom_call.1} parent=11 // pred_check_branch
          %237 = sbr.rel (%p235) target = $region32
        $region31: #{tpu_custom_call.1} parent=11 // pred_region
          %s239 = ssub.s32 4096, 4096
          %240 = vsyncadd [#allocation6], %s239
          %s241 = sshll.u32 [#allocation7], 4
          %s242 = int_to_ptr.vmem [resolvable:$true] %s241
          %247 = dma.hbm_to_vmem [thread:$0]  %s5, 4096, %s242, [#allocation6], 64, 64, 4
        $region32: #{tpu_custom_call.1} parent=11 // pred_fallthru
          _
        // Predicated region
        $region33: #{tpu_custom_call.1} parent=11 // pred_check
          %p248 = pneg %p172
        $region34: #{tpu_custom_call.1} parent=11 // pred_check_branch
          %250 = sbr.rel (%p248) target = $region36
        $region35: #{tpu_custom_call.1} parent=11 // pred_region
          _
        $region36: #{tpu_custom_call.1} parent=11 // pred_fallthru
          _
      $region12: #{tpu_custom_call.1} parent=5 // pred_fallthru
        _
      %p251 = scmp.lt.s32.totalorder %s20, 2
      // Predicated region
      $region37: #{tpu_custom_call.1} parent=5 // pred_check
        %p252 = pneg %p251
      $region38: #{tpu_custom_call.1} parent=5 // pred_check_branch
        %254 = sbr.rel (%p252) target = $region40
      $region39: #{tpu_custom_call.1} parent=5 // pred_region
        // Predicated region
        $region41: #{tpu_custom_call.1} parent=39 // pred_check
          %p255 = pneg %p40
        $region42: #{tpu_custom_call.1} parent=39 // pred_check_branch
          %257 = sbr.rel (%p255) target = $region44
        $region43: #{tpu_custom_call.1} parent=39 // pred_region
          %s258 = sand.u32 %s30, 1
          %s259 = scalar_lea.sflag [#allocation3], %s258
          %s260 = sand.u32 %s30, 1
          %s261 = smul.addr %s260, 128
          %s262 = scalar_lea.vmem [#allocation2], %s261
          %s263 = smul.u32 16, %s20
          %s265 = ssub.s32 2048, 2048
          %266 = vsyncadd %s259, %s265
          %s267 = smul.addr %s263, 128
          %s268 = scalar_lea.hbm %s0, %s267
          %s269 = sshll.u32 %s262, 4
          %s270 = int_to_ptr.vmem [resolvable:$true] %s269
          %275 = dma.hbm_to_vmem [thread:$0]  %s268, 2048, %s270, %s259, 128, 128, 8
        $region44: #{tpu_custom_call.1} parent=39 // pred_fallthru
          _
      $region40: #{tpu_custom_call.1} parent=5 // pred_fallthru
        _
      %p276 = scmp.le.s32.totalorder 1, %s20
      %p277 = scmp.lt.s32.totalorder %s20, 3
      %p278 = pnand %p276, %p277
      %p279 = pneg %p278
      // Predicated region
      $region45: #{tpu_custom_call.1} parent=5 // pred_check
        _
      $region46: #{tpu_custom_call.1} parent=5 // pred_check_branch
        %281 = sbr.rel (%p278) target = $region48
      $region47: #{tpu_custom_call.1} parent=5 // pred_region
        %s282 = ssub.s32 %s20, 1
        %s283 = sand.u32 %s33, 1
        %s284 = scalar_lea.sflag [#allocation3], %s283
        %s285 = sand.u32 %s33, 1
        %s286 = smul.addr %s285, 128
        %s287 = scalar_lea.vmem [#allocation2], %s286
        // Predicated region
        $region49: #{tpu_custom_call.1} parent=47 // pred_check
          %p288 = pneg %p46
        $region50: #{tpu_custom_call.1} parent=47 // pred_check_branch
          %290 = sbr.rel (%p288) target = $region52
        $region51: #{tpu_custom_call.1} parent=47 // pred_region
          %291 = dma.done %s284, 2048
        $region52: #{tpu_custom_call.1} parent=47 // pred_fallthru
          _
        // Predicated region
        $region53: #{tpu_custom_call.1} parent=47 // pred_check
          %p292 = pneg %p109
        $region54: #{tpu_custom_call.1} parent=47 // pred_check_branch
          %294 = sbr.rel (%p292) target = $region56
        $region55: #{tpu_custom_call.1} parent=47 // pred_region
          %295 = dma.done [#allocation6], 4096
        $region56: #{tpu_custom_call.1} parent=47 // pred_fallthru
          _
        // Predicated region
        $region57: #{tpu_custom_call.1} parent=47 // pred_check
          %p296 = pneg %p151
        $region58: #{tpu_custom_call.1} parent=47 // pred_check_branch
          %298 = sbr.rel (%p296) target = $region60
        $region59: #{tpu_custom_call.1} parent=47 // pred_region
          %299 = dma.done [#allocation6], 4096
        $region60: #{tpu_custom_call.1} parent=47 // pred_fallthru
          _
        %s300 = sand.u32 %s33, 1
        %s301 = scalar_lea.sflag [#allocation3], %s300
        %s302 = sand.u32 %s33, 1
        %s303 = smul.addr %s302, 128
        %s304 = scalar_lea.vmem [#allocation2], %s303
        %p305 = pneg %p46
        %p306 = pneg %p43
        %p307 = pneg %p67
        %p308 = pneg %p64
        %p309 = pneg %p88
        %p310 = pneg %p85
        %p311 = pneg %p109
        %p312 = pneg %p106
        %p313 = pneg %p130
        %p314 = pneg %p127
        %p315 = pneg %p151
        %p316 = pneg %p148
        %p317 = pneg %p172
        %p318 = pneg %p169
        %p319 = pneg %p198
        %p320 = pneg %p195
        %s321 = sand.u32 %s185, 1
        %s322 = scalar_lea.sflag [#allocation4], %s321
        %s323 = sand.u32 %s185, 1
        %s324 = smul.addr %s323, 128
        %s325 = scalar_lea.vmem [#allocation8], %s324
        %s326 = smul.u32 16, %s25
        %s327 = smul.u32 16, %s25
        %v329 = vld [vmem:[%s287] sm:$0xff]
        %v330 = vld [vmem:[%s287 + $0x8] sm:$0xff]
        %v331 = vld [vmem:[%s287 + $0x10] sm:$0xff]
        %v332 = vld [vmem:[%s287 + $0x18] sm:$0xff]
        %v333 = vld [vmem:[%s287 + $0x20] sm:$0xff]
        %v334 = vld [vmem:[%s287 + $0x28] sm:$0xff]
        %v335 = vld [vmem:[%s287 + $0x30] sm:$0xff]
        %v336 = vld [vmem:[%s287 + $0x38] sm:$0xff]
        %v337 = vld [vmem:[%s287 + $0x40] sm:$0xff]
        %v338 = vld [vmem:[%s287 + $0x48] sm:$0xff]
        %v339 = vld [vmem:[%s287 + $0x50] sm:$0xff]
        %v340 = vld [vmem:[%s287 + $0x58] sm:$0xff]
        %v341 = vld [vmem:[%s287 + $0x60] sm:$0xff]
        %v342 = vld [vmem:[%s287 + $0x68] sm:$0xff]
        %v343 = vld [vmem:[%s287 + $0x70] sm:$0xff]
        %v344 = vld [vmem:[%s287 + $0x78] sm:$0xff]
        %345 = vadd.xlane.f32.xlu0 %v329
        %v346 = vpop.xlane.xlu0 %345
        %347 = vadd.xlane.f32.xlu0 %v330
        %v348 = vpop.xlane.xlu0 %347
        %349 = vadd.xlane.f32.xlu0 %v331
        %v350 = vpop.xlane.xlu0 %349
        %351 = vadd.xlane.f32.xlu0 %v332
        %v352 = vpop.xlane.xlu0 %351
        %353 = vadd.xlane.f32.xlu0 %v333
        %v354 = vpop.xlane.xlu0 %353
        %355 = vadd.xlane.f32.xlu0 %v334
        %v356 = vpop.xlane.xlu0 %355
        %357 = vadd.xlane.f32.xlu0 %v335
        %v358 = vpop.xlane.xlu0 %357
        %359 = vadd.xlane.f32.xlu0 %v336
        %v360 = vpop.xlane.xlu0 %359
        %361 = vadd.xlane.f32.xlu0 %v337
        %v362 = vpop.xlane.xlu0 %361
        %363 = vadd.xlane.f32.xlu0 %v338
        %v364 = vpop.xlane.xlu0 %363
        %365 = vadd.xlane.f32.xlu0 %v339
        %v366 = vpop.xlane.xlu0 %365
        %367 = vadd.xlane.f32.xlu0 %v340
        %v368 = vpop.xlane.xlu0 %367
        %369 = vadd.xlane.f32.xlu0 %v341
        %v370 = vpop.xlane.xlu0 %369
        %371 = vadd.xlane.f32.xlu0 %v342
        %v372 = vpop.xlane.xlu0 %371
        %373 = vadd.xlane.f32.xlu0 %v343
        %v374 = vpop.xlane.xlu0 %373
        %375 = vadd.xlane.f32.xlu0 %v344
        %v376 = vpop.xlane.xlu0 %375
        %v377 = vrcp.pop 128.0
        %v378 = vmul.f32 %v346, %v377
        %v379 = vmul.f32 %v348, %v377
        %v380 = vmul.f32 %v350, %v377
        %v381 = vmul.f32 %v352, %v377
        %v382 = vmul.f32 %v354, %v377
        %v383 = vmul.f32 %v356, %v377
        %v384 = vmul.f32 %v358, %v377
        %v385 = vmul.f32 %v360, %v377
        %v386 = vmul.f32 %v362, %v377
        %v387 = vmul.f32 %v364, %v377
        %v388 = vmul.f32 %v366, %v377
        %v389 = vmul.f32 %v368, %v377
        %v390 = vmul.f32 %v370, %v377
        %v391 = vmul.f32 %v372, %v377
        %v392 = vmul.f32 %v374, %v377
        %v393 = vmul.f32 %v376, %v377
        %v394 = vsub.f32 %v329, %v378
        %v395 = vsub.f32 %v330, %v379
        %v396 = vsub.f32 %v331, %v380
        %v397 = vsub.f32 %v332, %v381
        %v398 = vsub.f32 %v333, %v382
        %v399 = vsub.f32 %v334, %v383
        %v400 = vsub.f32 %v335, %v384
        %v401 = vsub.f32 %v336, %v385
        %v402 = vsub.f32 %v337, %v386
        %v403 = vsub.f32 %v338, %v387
        %v404 = vsub.f32 %v339, %v388
        %v405 = vsub.f32 %v340, %v389
        %v406 = vsub.f32 %v341, %v390
        %v407 = vsub.f32 %v342, %v391
        %v408 = vsub.f32 %v343, %v392
        %v409 = vsub.f32 %v344, %v393
        %v410 = vmul.f32 %v394, %v394
        %v411 = vmul.f32 %v395, %v395
        %v412 = vmul.f32 %v396, %v396
        %v413 = vmul.f32 %v397, %v397
        %v414 = vmul.f32 %v398, %v398
        %v415 = vmul.f32 %v399, %v399
        %v416 = vmul.f32 %v400, %v400
        %v417 = vmul.f32 %v401, %v401
        %v418 = vmul.f32 %v402, %v402
        %v419 = vmul.f32 %v403, %v403
        %v420 = vmul.f32 %v404, %v404
        %v421 = vmul.f32 %v405, %v405
        %v422 = vmul.f32 %v406, %v406
        %v423 = vmul.f32 %v407, %v407
        %v424 = vmul.f32 %v408, %v408
        %v425 = vmul.f32 %v409, %v409
        %426 = vadd.xlane.f32.xlu0 %v410
        %v427 = vpop.xlane.xlu0 %426
        %428 = vadd.xlane.f32.xlu0 %v411
        %v429 = vpop.xlane.xlu0 %428
        %430 = vadd.xlane.f32.xlu0 %v412
        %v431 = vpop.xlane.xlu0 %430
        %432 = vadd.xlane.f32.xlu0 %v413
        %v433 = vpop.xlane.xlu0 %432
        %434 = vadd.xlane.f32.xlu0 %v414
        %v435 = vpop.xlane.xlu0 %434
        %436 = vadd.xlane.f32.xlu0 %v415
        %v437 = vpop.xlane.xlu0 %436
        %438 = vadd.xlane.f32.xlu0 %v416
        %v439 = vpop.xlane.xlu0 %438
        %440 = vadd.xlane.f32.xlu0 %v417
        %v441 = vpop.xlane.xlu0 %440
        %442 = vadd.xlane.f32.xlu0 %v418
        %v443 = vpop.xlane.xlu0 %442
        %444 = vadd.xlane.f32.xlu0 %v419
        %v445 = vpop.xlane.xlu0 %444
        %446 = vadd.xlane.f32.xlu0 %v420
        %v447 = vpop.xlane.xlu0 %446
        %448 = vadd.xlane.f32.xlu0 %v421
        %v449 = vpop.xlane.xlu0 %448
        %450 = vadd.xlane.f32.xlu0 %v422
        %v451 = vpop.xlane.xlu0 %450
        %452 = vadd.xlane.f32.xlu0 %v423
        %v453 = vpop.xlane.xlu0 %452
        %454 = vadd.xlane.f32.xlu0 %v424
        %v455 = vpop.xlane.xlu0 %454
        %456 = vadd.xlane.f32.xlu0 %v425
        %v457 = vpop.xlane.xlu0 %456
        %v458 = vmul.f32 %v427, %v377
        %v459 = vmul.f32 %v429, %v377
        %v460 = vmul.f32 %v431, %v377
        %v461 = vmul.f32 %v433, %v377
        %v462 = vmul.f32 %v435, %v377
        %v463 = vmul.f32 %v437, %v377
        %v464 = vmul.f32 %v439, %v377
        %v465 = vmul.f32 %v441, %v377
        %v466 = vmul.f32 %v443, %v377
        %v467 = vmul.f32 %v445, %v377
        %v468 = vmul.f32 %v447, %v377
        %v469 = vmul.f32 %v449, %v377
        %v470 = vmul.f32 %v451, %v377
        %v471 = vmul.f32 %v453, %v377
        %v472 = vmul.f32 %v455, %v377
        %v473 = vmul.f32 %v457, %v377
        %v474 = vadd.f32 %v458, 1e-05
        %v475 = vadd.f32 %v459, 1e-05
        %v476 = vadd.f32 %v460, 1e-05
        %v477 = vadd.f32 %v461, 1e-05
        %v478 = vadd.f32 %v462, 1e-05
        %v479 = vadd.f32 %v463, 1e-05
        %v480 = vadd.f32 %v464, 1e-05
        %v481 = vadd.f32 %v465, 1e-05
        %v482 = vadd.f32 %v466, 1e-05
        %v483 = vadd.f32 %v467, 1e-05
        %v484 = vadd.f32 %v468, 1e-05
        %v485 = vadd.f32 %v469, 1e-05
        %v486 = vadd.f32 %v470, 1e-05
        %v487 = vadd.f32 %v471, 1e-05
        %v488 = vadd.f32 %v472, 1e-05
        %v489 = vadd.f32 %v473, 1e-05
        %v490 = vrsqrt.pop %v474
        %v491 = vrsqrt.pop %v475
        %v492 = vrsqrt.pop %v476
        %v493 = vrsqrt.pop %v477
        %v494 = vrsqrt.pop %v478
        %v495 = vrsqrt.pop %v479
        %v496 = vrsqrt.pop %v480
        %v497 = vrsqrt.pop %v481
        %v498 = vrsqrt.pop %v482
        %v499 = vrsqrt.pop %v483
        %v500 = vrsqrt.pop %v484
        %v501 = vrsqrt.pop %v485
        %v502 = vrsqrt.pop %v486
        %v503 = vrsqrt.pop %v487
        %v504 = vrsqrt.pop %v488
        %v505 = vrsqrt.pop %v489
        %v506 = vmul.f32 %v394, %v490
        %v507 = vmul.f32 %v395, %v491
        %v508 = vmul.f32 %v396, %v492
        %v509 = vmul.f32 %v397, %v493
        %v510 = vmul.f32 %v398, %v494
        %v511 = vmul.f32 %v399, %v495
        %v512 = vmul.f32 %v400, %v496
        %v513 = vmul.f32 %v401, %v497
        %v514 = vmul.f32 %v402, %v498
        %v515 = vmul.f32 %v403, %v499
        %v516 = vmul.f32 %v404, %v500
        %v517 = vmul.f32 %v405, %v501
        %v518 = vmul.f32 %v406, %v502
        %v519 = vmul.f32 %v407, %v503
        %v520 = vmul.f32 %v408, %v504
        %v521 = vmul.f32 %v409, %v505
        %v522 = vld [vmem:[%s1] sm:$0x1]
        %v524 = vlaneseq
        %v525 = vshrl.u32 %v524, 7
        %v526 = vsub.s32 0, %v525
        %v527 = vrot.slane %v522, %v526
        %v529 = vmul.f32 %v506, %v527
        %v530 = vmul.f32 %v507, %v527
        %v531 = vmul.f32 %v508, %v527
        %v532 = vmul.f32 %v509, %v527
        %v533 = vmul.f32 %v510, %v527
        %v534 = vmul.f32 %v511, %v527
        %v535 = vmul.f32 %v512, %v527
        %v536 = vmul.f32 %v513, %v527
        %v537 = vmul.f32 %v514, %v527
        %v538 = vmul.f32 %v515, %v527
        %v539 = vmul.f32 %v516, %v527
        %v540 = vmul.f32 %v517, %v527
        %v541 = vmul.f32 %v518, %v527
        %v542 = vmul.f32 %v519, %v527
        %v543 = vmul.f32 %v520, %v527
        %v544 = vmul.f32 %v521, %v527
        %v545 = vld [vmem:[%s2] sm:$0x1]
        %v547 = vlaneseq
        %v548 = vshrl.u32 %v547, 7
        %v549 = vsub.s32 0, %v548
        %v550 = vrot.slane %v545, %v549
        %v552 = vadd.f32 %v529, %v550
        %v553 = vadd.f32 %v530, %v550
        %v554 = vadd.f32 %v531, %v550
        %v555 = vadd.f32 %v532, %v550
        %v556 = vadd.f32 %v533, %v550
        %v557 = vadd.f32 %v534, %v550
        %v558 = vadd.f32 %v535, %v550
        %v559 = vadd.f32 %v536, %v550
        %v560 = vadd.f32 %v537, %v550
        %v561 = vadd.f32 %v538, %v550
        %v562 = vadd.f32 %v539, %v550
        %v563 = vadd.f32 %v540, %v550
        %v564 = vadd.f32 %v541, %v550
        %v565 = vadd.f32 %v542, %v550
        %v566 = vadd.f32 %v543, %v550
        %v567 = vadd.f32 %v544, %v550
        %v568 = vpack.c.bf16 %v553, %v552
        %v569 = vpack.c.bf16 %v555, %v554
        %v570 = vpack.c.bf16 %v557, %v556
        %v571 = vpack.c.bf16 %v559, %v558
        %v572 = vpack.c.bf16 %v561, %v560
        %v573 = vpack.c.bf16 %v563, %v562
        %v574 = vpack.c.bf16 %v565, %v564
        %v575 = vpack.c.bf16 %v567, %v566
        %v576 = vld [vmem:[#allocation5] sm:$0xff]
        %v577 = vld [vmem:[#allocation5 + $0x8] sm:$0xff]
        %v578 = vld [vmem:[#allocation5 + $0x10] sm:$0xff]
        %v579 = vld [vmem:[#allocation5 + $0x18] sm:$0xff]
        %v580 = vld [vmem:[#allocation5 + $0x20] sm:$0xff]
        %v581 = vld [vmem:[#allocation5 + $0x28] sm:$0xff]
        %v582 = vld [vmem:[#allocation5 + $0x30] sm:$0xff]
        %v583 = vld [vmem:[#allocation5 + $0x38] sm:$0xff]
        %v584 = vld [vmem:[#allocation5 + $0x40] sm:$0xff]
        %v585 = vld [vmem:[#allocation5 + $0x48] sm:$0xff]
        %v586 = vld [vmem:[#allocation5 + $0x50] sm:$0xff]
        %v587 = vld [vmem:[#allocation5 + $0x58] sm:$0xff]
        %v588 = vld [vmem:[#allocation5 + $0x60] sm:$0xff]
        %v589 = vld [vmem:[#allocation5 + $0x68] sm:$0xff]
        %v590 = vld [vmem:[#allocation5 + $0x70] sm:$0xff]
        %v591 = vld [vmem:[#allocation5 + $0x78] sm:$0xff]
        %v592 = vld [vmem:[#allocation5 + $0x80] sm:$0xff]
        %v593 = vld [vmem:[#allocation5 + $0x88] sm:$0xff]
        %v594 = vld [vmem:[#allocation5 + $0x90] sm:$0xff]
        %v595 = vld [vmem:[#allocation5 + $0x98] sm:$0xff]
        %v596 = vld [vmem:[#allocation5 + $0xa0] sm:$0xff]
        %v597 = vld [vmem:[#allocation5 + $0xa8] sm:$0xff]
        %v598 = vld [vmem:[#allocation5 + $0xb0] sm:$0xff]
        %v599 = vld [vmem:[#allocation5 + $0xb8] sm:$0xff]
        %v600 = vld [vmem:[#allocation5 + $0xc0] sm:$0xff]
        %v601 = vld [vmem:[#allocation5 + $0xc8] sm:$0xff]
        %v602 = vld [vmem:[#allocation5 + $0xd0] sm:$0xff]
        %v603 = vld [vmem:[#allocation5 + $0xd8] sm:$0xff]
        %v604 = vld [vmem:[#allocation5 + $0xe0] sm:$0xff]
        %v605 = vld [vmem:[#allocation5 + $0xe8] sm:$0xff]
        %v606 = vld [vmem:[#allocation5 + $0xf0] sm:$0xff]
        %v607 = vld [vmem:[#allocation5 + $0xf8] sm:$0xff]
        %v608 = vld [vmem:[%s4] sm:$0xf]
        %v610 = vlaneseq
        %v611 = vshrl.u32 %v610, 7
        %v612 = vsub.s32 0, %v611
        %v613 = vrot.slane %v608, %v612
        %v614 = vlaneseq
        %v615 = vshrl.u32 %v614, 7
        %v616 = vsub.s32 1, %v615
        %v617 = vrot.slane %v608, %v616
        %v618 = vlaneseq
        %v619 = vshrl.u32 %v618, 7
        %v620 = vsub.s32 2, %v619
        %v621 = vrot.slane %v608, %v620
        %v622 = vlaneseq
        %v623 = vshrl.u32 %v622, 7
        %v624 = vsub.s32 3, %v623
        %v625 = vrot.slane %v608, %v624
        %v662 = vunpack.c.l.b16 %v576
        %v663 = vunpack.c.h.b16 %v576
        %v664 = vunpack.c.l.b16 %v577
        %v665 = vunpack.c.h.b16 %v577
        %v666 = vunpack.c.l.b16 %v578
        %v667 = vunpack.c.h.b16 %v578
        %v668 = vunpack.c.l.b16 %v579
        %v669 = vunpack.c.h.b16 %v579
        %v670 = vunpack.c.l.b16 %v580
        %v671 = vunpack.c.h.b16 %v580
        %v672 = vunpack.c.l.b16 %v581
        %v673 = vunpack.c.h.b16 %v581
        %v674 = vunpack.c.l.b16 %v582
        %v675 = vunpack.c.h.b16 %v582
        %v676 = vunpack.c.l.b16 %v583
        %v677 = vunpack.c.h.b16 %v583
        %v678 = vunpack.c.l.b16 %v584
        %v679 = vunpack.c.h.b16 %v584
        %v680 = vunpack.c.l.b16 %v585
        %v681 = vunpack.c.h.b16 %v585
        %v682 = vunpack.c.l.b16 %v586
        %v683 = vunpack.c.h.b16 %v586
        %v684 = vunpack.c.l.b16 %v587
        %v685 = vunpack.c.h.b16 %v587
        %v686 = vunpack.c.l.b16 %v588
        %v687 = vunpack.c.h.b16 %v588
        %v688 = vunpack.c.l.b16 %v589
        %v689 = vunpack.c.h.b16 %v589
        %v690 = vunpack.c.l.b16 %v590
        %v691 = vunpack.c.h.b16 %v590
        %v692 = vunpack.c.l.b16 %v591
        %v693 = vunpack.c.h.b16 %v591
        %v694 = vunpack.c.l.b16 %v592
        %v695 = vunpack.c.h.b16 %v592
        %v696 = vunpack.c.l.b16 %v593
        %v697 = vunpack.c.h.b16 %v593
        %v698 = vunpack.c.l.b16 %v594
        %v699 = vunpack.c.h.b16 %v594
        %v700 = vunpack.c.l.b16 %v595
        %v701 = vunpack.c.h.b16 %v595
        %v702 = vunpack.c.l.b16 %v596
        %v703 = vunpack.c.h.b16 %v596
        %v704 = vunpack.c.l.b16 %v597
        %v705 = vunpack.c.h.b16 %v597
        %v706 = vunpack.c.l.b16 %v598
        %v707 = vunpack.c.h.b16 %v598
        %v708 = vunpack.c.l.b16 %v599
        %v709 = vunpack.c.h.b16 %v599
        %v710 = vunpack.c.l.b16 %v600
        %v711 = vunpack.c.h.b16 %v600
        %v712 = vunpack.c.l.b16 %v601
        %v713 = vunpack.c.h.b16 %v601
        %v714 = vunpack.c.l.b16 %v602
        %v715 = vunpack.c.h.b16 %v602
        %v716 = vunpack.c.l.b16 %v603
        %v717 = vunpack.c.h.b16 %v603
        %v718 = vunpack.c.l.b16 %v604
        %v719 = vunpack.c.h.b16 %v604
        %v720 = vunpack.c.l.b16 %v605
        %v721 = vunpack.c.h.b16 %v605
        %v722 = vunpack.c.l.b16 %v606
        %v723 = vunpack.c.h.b16 %v606
        %v724 = vunpack.c.l.b16 %v607
        %v725 = vunpack.c.h.b16 %v607
        %v726 = vpack.c.b16 %v666, %v662
        %v727 = vpack.c.b16 %v667, %v663
        %v728 = vpack.c.b16 %v668, %v664
        %v729 = vpack.c.b16 %v669, %v665
        %v730 = vpack.c.b16 %v674, %v670
        %v731 = vpack.c.b16 %v675, %v671
        %v732 = vpack.c.b16 %v676, %v672
        %v733 = vpack.c.b16 %v677, %v673
        %v734 = vpack.c.b16 %v682, %v678
        %v735 = vpack.c.b16 %v683, %v679
        %v736 = vpack.c.b16 %v684, %v680
        %v737 = vpack.c.b16 %v685, %v681
        %v738 = vpack.c.b16 %v690, %v686
        %v739 = vpack.c.b16 %v691, %v687
        %v740 = vpack.c.b16 %v692, %v688
        %v741 = vpack.c.b16 %v693, %v689
        %v742 = vpack.c.b16 %v698, %v694
        %v743 = vpack.c.b16 %v699, %v695
        %v744 = vpack.c.b16 %v700, %v696
        %v745 = vpack.c.b16 %v701, %v697
        %v746 = vpack.c.b16 %v706, %v702
        %v747 = vpack.c.b16 %v707, %v703
        %v748 = vpack.c.b16 %v708, %v704
        %v749 = vpack.c.b16 %v709, %v705
        %v750 = vpack.c.b16 %v714, %v710
        %v751 = vpack.c.b16 %v715, %v711
        %v752 = vpack.c.b16 %v716, %v712
        %v753 = vpack.c.b16 %v717, %v713
        %v754 = vpack.c.b16 %v722, %v718
        %v755 = vpack.c.b16 %v723, %v719
        %v756 = vpack.c.b16 %v724, %v720
        %v757 = vpack.c.b16 %v725, %v721
        %790 = vmatprep.subr.bf16.mxu0 %v727
        %791 = vmatpush1.bf16.msra.mxu0 %v726
        %792 = vmatprep.subr.bf16.mxu0 %v731
        %793 = vmatpush1.bf16.msra.mxu0 %v730
        %794 = vmatprep.subr.bf16.mxu0 %v735
        %795 = vmatpush1.bf16.msra.mxu0 %v734
        %796 = vmatprep.subr.bf16.mxu0 %v739
        %797 = vmatpush1.bf16.msra.mxu0 %v738
        %798 = vmatprep.subr.bf16.mxu0 %v743
        %799 = vmatpush1.bf16.msra.mxu0 %v742
        %800 = vmatprep.subr.bf16.mxu0 %v747
        %801 = vmatpush1.bf16.msra.mxu0 %v746
        %802 = vmatprep.subr.bf16.mxu0 %v751
        %803 = vmatpush1.bf16.msra.mxu0 %v750
        %804 = vmatprep.subr.bf16.mxu0 %v755
        %805 = vmatpush1.bf16.msra.mxu0 %v754
        %806 = vmatprep.subr.bf16.mxu0 0
        %807 = vmatpush1.bf16.msra.mxu0 0
        %808 = vmatprep.subr.bf16.mxu0 0
        %809 = vmatpush1.bf16.msra.mxu0 0
        %810 = vmatprep.subr.bf16.mxu0 0
        %811 = vmatpush1.bf16.msra.mxu0 0
        %812 = vmatprep.subr.bf16.mxu0 0
        %813 = vmatpush1.bf16.msra.mxu0 0
        %814 = vmatprep.subr.bf16.mxu0 0
        %815 = vmatpush1.bf16.msra.mxu0 0
        %816 = vmatprep.subr.bf16.mxu0 0
        %817 = vmatpush1.bf16.msra.mxu0 0
        %818 = vmatprep.subr.bf16.mxu0 0
        %819 = vmatpush1.bf16.msra.mxu0 0
        %820 = vmatprep.subr.bf16.mxu0 0
        %821 = vmatpush1.bf16.msra.mxu0 0
        %822 = vmatprep.mubr.bf16.mxu0 0
        %823 = vmatmul.mubr.bf16.gmra.mrb[0].mxu0 %v568
        %v824 = vpop.f32.mrb[0].mxu0
        %v825 = vadd.f32 %v613, %v824
        %v826 = vpop.f32.mrb[0].mxu0
        %v827 = vadd.f32 %v617, %v826
        %v828 = vpop.f32.mrb[0].mxu0
        %v829 = vadd.f32 %v613, %v828
        %v830 = vpop.f32.mrb[0].mxu0
        %v831 = vadd.f32 %v617, %v830
        %832 = vmatprep.mubr.bf16.mxu0 0
        %833 = vmatmul.mubr.bf16.gmra.mrb[0].mxu0 %v569
        %v834 = vpop.f32.mrb[0].mxu0
        %v835 = vadd.f32 %v613, %v834
        %v836 = vpop.f32.mrb[0].mxu0
        %v837 = vadd.f32 %v617, %v836
        %v838 = vpop.f32.mrb[0].mxu0
        %v839 = vadd.f32 %v613, %v838
        %v840 = vpop.f32.mrb[0].mxu0
        %v841 = vadd.f32 %v617, %v840
        %842 = vmatprep.mubr.bf16.mxu0 0
        %843 = vmatmul.mubr.bf16.gmra.mrb[0].mxu0 %v570
        %v844 = vpop.f32.mrb[0].mxu0
        %v845 = vadd.f32 %v613, %v844
        %v846 = vpop.f32.mrb[0].mxu0
        %v847 = vadd.f32 %v617, %v846
        %v848 = vpop.f32.mrb[0].mxu0
        %v849 = vadd.f32 %v613, %v848
        %v850 = vpop.f32.mrb[0].mxu0
        %v851 = vadd.f32 %v617, %v850
        %852 = vmatprep.mubr.bf16.mxu0 0
        %853 = vmatmul.mubr.bf16.gmra.mrb[0].mxu0 %v571
        %v854 = vpop.f32.mrb[0].mxu0
        %v855 = vadd.f32 %v613, %v854
        %v856 = vpop.f32.mrb[0].mxu0
        %v857 = vadd.f32 %v617, %v856
        %v858 = vpop.f32.mrb[0].mxu0
        %v859 = vadd.f32 %v613, %v858
        %v860 = vpop.f32.mrb[0].mxu0
        %v861 = vadd.f32 %v617, %v860
        %862 = vmatprep.mubr.bf16.mxu0 0
        %863 = vmatmul.mubr.bf16.gmra.mrb[0].mxu0 %v572
        %v864 = vpop.f32.mrb[0].mxu0
        %v865 = vadd.f32 %v613, %v864
        %v866 = vpop.f32.mrb[0].mxu0
        %v867 = vadd.f32 %v617, %v866
        %v868 = vpop.f32.mrb[0].mxu0
        %v869 = vadd.f32 %v613, %v868
        %v870 = vpop.f32.mrb[0].mxu0
        %v871 = vadd.f32 %v617, %v870
        %872 = vmatprep.mubr.bf16.mxu0 0
        %873 = vmatmul.mubr.bf16.gmra.mrb[0].mxu0 %v573
        %v874 = vpop.f32.mrb[0].mxu0
        %v875 = vadd.f32 %v613, %v874
        %v876 = vpop.f32.mrb[0].mxu0
        %v877 = vadd.f32 %v617, %v876
        %v878 = vpop.f32.mrb[0].mxu0
        %v879 = vadd.f32 %v613, %v878
        %v880 = vpop.f32.mrb[0].mxu0
        %v881 = vadd.f32 %v617, %v880
        %882 = vmatprep.mubr.bf16.mxu0 0
        %883 = vmatmul.mubr.bf16.gmra.mrb[0].mxu0 %v574
        %v884 = vpop.f32.mrb[0].mxu0
        %v885 = vadd.f32 %v613, %v884
        %v886 = vpop.f32.mrb[0].mxu0
        %v887 = vadd.f32 %v617, %v886
        %v888 = vpop.f32.mrb[0].mxu0
        %v889 = vadd.f32 %v613, %v888
        %v890 = vpop.f32.mrb[0].mxu0
        %v891 = vadd.f32 %v617, %v890
        %892 = vmatprep.mubr.bf16.mxu0 0
        %893 = vmatmul.mubr.bf16.gmra.mrb[0].mxu0 %v575
        %v894 = vpop.f32.mrb[0].mxu0
        %v895 = vadd.f32 %v613, %v894
        %v896 = vpop.f32.mrb[0].mxu0
        %v897 = vadd.f32 %v617, %v896
        %v898 = vpop.f32.mrb[0].mxu0
        %v899 = vadd.f32 %v613, %v898
        %v900 = vpop.f32.mrb[0].mxu0
        %v901 = vadd.f32 %v617, %v900
        %902 = vdwg.mxu0
        %903 = vmatprep.subr.bf16.mxu0 %v729
        %904 = vmatpush1.bf16.msra.mxu0 %v728
        %905 = vmatprep.subr.bf16.mxu0 %v733
        %906 = vmatpush1.bf16.msra.mxu0 %v732
        %907 = vmatprep.subr.bf16.mxu0 %v737
        %908 = vmatpush1.bf16.msra.mxu0 %v736
        %909 = vmatprep.subr.bf16.mxu0 %v741
        %910 = vmatpush1.bf16.msra.mxu0 %v740
        %911 = vmatprep.subr.bf16.mxu0 %v745
        %912 = vmatpush1.bf16.msra.mxu0 %v744
        %913 = vmatprep.subr.bf16.mxu0 %v749
        %914 = vmatpush1.bf16.msra.mxu0 %v748
        %915 = vmatprep.subr.bf16.mxu0 %v753
        %916 = vmatpush1.bf16.msra.mxu0 %v752
        %917 = vmatprep.subr.bf16.mxu0 %v757
        %918 = vmatpush1.bf16.msra.mxu0 %v756
        %919 = vmatprep.subr.bf16.mxu0 0
        %920 = vmatpush1.bf16.msra.mxu0 0
        %921 = vmatprep.subr.bf16.mxu0 0
        %922 = vmatpush1.bf16.msra.mxu0 0
        %923 = vmatprep.subr.bf16.mxu0 0
        %924 = vmatpush1.bf16.msra.mxu0 0
        %925 = vmatprep.subr.bf16.mxu0 0
        %926 = vmatpush1.bf16.msra.mxu0 0
        %927 = vmatprep.subr.bf16.mxu0 0
        %928 = vmatpush1.bf16.msra.mxu0 0
        %929 = vmatprep.subr.bf16.mxu0 0
        %930 = vmatpush1.bf16.msra.mxu0 0
        %931 = vmatprep.subr.bf16.mxu0 0
        %932 = vmatpush1.bf16.msra.mxu0 0
        %933 = vmatprep.subr.bf16.mxu0 0
        %934 = vmatpush1.bf16.msra.mxu0 0
        %935 = vmatprep.mubr.bf16.mxu0 0
        %936 = vmatmul.mubr.bf16.gmra.mrb[0].mxu0 %v568
        %v937 = vpop.f32.mrb[0].mxu0
        %v938 = vadd.f32 %v621, %v937
        %v939 = vpop.f32.mrb[0].mxu0
        %v940 = vadd.f32 %v625, %v939
        %v941 = vpop.f32.mrb[0].mxu0
        %v942 = vadd.f32 %v621, %v941
        %v943 = vpop.f32.mrb[0].mxu0
        %v944 = vadd.f32 %v625, %v943
        %945 = vmatprep.mubr.bf16.mxu0 0
        %946 = vmatmul.mubr.bf16.gmra.mrb[0].mxu0 %v569
        %v947 = vpop.f32.mrb[0].mxu0
        %v948 = vadd.f32 %v621, %v947
        %v949 = vpop.f32.mrb[0].mxu0
        %v950 = vadd.f32 %v625, %v949
        %v951 = vpop.f32.mrb[0].mxu0
        %v952 = vadd.f32 %v621, %v951
        %v953 = vpop.f32.mrb[0].mxu0
        %v954 = vadd.f32 %v625, %v953
        %955 = vmatprep.mubr.bf16.mxu0 0
        %956 = vmatmul.mubr.bf16.gmra.mrb[0].mxu0 %v570
        %v957 = vpop.f32.mrb[0].mxu0
        %v958 = vadd.f32 %v621, %v957
        %v959 = vpop.f32.mrb[0].mxu0
        %v960 = vadd.f32 %v625, %v959
        %v961 = vpop.f32.mrb[0].mxu0
        %v962 = vadd.f32 %v621, %v961
        %v963 = vpop.f32.mrb[0].mxu0
        %v964 = vadd.f32 %v625, %v963
        %965 = vmatprep.mubr.bf16.mxu0 0
        %966 = vmatmul.mubr.bf16.gmra.mrb[0].mxu0 %v571
        %v967 = vpop.f32.mrb[0].mxu0
        %v968 = vadd.f32 %v621, %v967
        %v969 = vpop.f32.mrb[0].mxu0
        %v970 = vadd.f32 %v625, %v969
        %v971 = vpop.f32.mrb[0].mxu0
        %v972 = vadd.f32 %v621, %v971
        %v973 = vpop.f32.mrb[0].mxu0
        %v974 = vadd.f32 %v625, %v973
        %975 = vmatprep.mubr.bf16.mxu0 0
        %976 = vmatmul.mubr.bf16.gmra.mrb[0].mxu0 %v572
        %v977 = vpop.f32.mrb[0].mxu0
        %v978 = vadd.f32 %v621, %v977
        %v979 = vpop.f32.mrb[0].mxu0
        %v980 = vadd.f32 %v625, %v979
        %v981 = vpop.f32.mrb[0].mxu0
        %v982 = vadd.f32 %v621, %v981
        %v983 = vpop.f32.mrb[0].mxu0
        %v984 = vadd.f32 %v625, %v983
        %985 = vmatprep.mubr.bf16.mxu0 0
        %986 = vmatmul.mubr.bf16.gmra.mrb[0].mxu0 %v573
        %v987 = vpop.f32.mrb[0].mxu0
        %v988 = vadd.f32 %v621, %v987
        %v989 = vpop.f32.mrb[0].mxu0
        %v990 = vadd.f32 %v625, %v989
        %v991 = vpop.f32.mrb[0].mxu0
        %v992 = vadd.f32 %v621, %v991
        %v993 = vpop.f32.mrb[0].mxu0
        %v994 = vadd.f32 %v625, %v993
        %995 = vmatprep.mubr.bf16.mxu0 0
        %996 = vmatmul.mubr.bf16.gmra.mrb[0].mxu0 %v574
        %v997 = vpop.f32.mrb[0].mxu0
        %v998 = vadd.f32 %v621, %v997
        %v999 = vpop.f32.mrb[0].mxu0
        %v1000 = vadd.f32 %v625, %v999
        %v1001 = vpop.f32.mrb[0].mxu0
        %v1002 = vadd.f32 %v621, %v1001
        %v1003 = vpop.f32.mrb[0].mxu0
        %v1004 = vadd.f32 %v625, %v1003
        %1005 = vmatprep.mubr.bf16.mxu0 0
        %1006 = vmatmul.mubr.bf16.gmra.mrb[0].mxu0 %v575
        %v1007 = vpop.f32.mrb[0].mxu0
        %v1008 = vadd.f32 %v621, %v1007
        %v1009 = vpop.f32.mrb[0].mxu0
        %v1010 = vadd.f32 %v625, %v1009
        %v1011 = vpop.f32.mrb[0].mxu0
        %v1012 = vadd.f32 %v621, %v1011
        %v1013 = vpop.f32.mrb[0].mxu0
        %v1014 = vadd.f32 %v625, %v1013
        %1015 = vdwg.mxu0
        %v1016 = vxor.u32 %v825, 2147483648
        %v1017 = vxor.u32 %v827, 2147483648
        %v1018 = vxor.u32 %v938, 2147483648
        %v1019 = vxor.u32 %v940, 2147483648
        %v1020 = vxor.u32 %v829, 2147483648
        %v1021 = vxor.u32 %v831, 2147483648
        %v1022 = vxor.u32 %v942, 2147483648
        %v1023 = vxor.u32 %v944, 2147483648
        %v1024 = vxor.u32 %v835, 2147483648
        %v1025 = vxor.u32 %v837, 2147483648
        %v1026 = vxor.u32 %v948, 2147483648
        %v1027 = vxor.u32 %v950, 2147483648
        %v1028 = vxor.u32 %v839, 2147483648
        %v1029 = vxor.u32 %v841, 2147483648
        %v1030 = vxor.u32 %v952, 2147483648
        %v1031 = vxor.u32 %v954, 2147483648
        %v1032 = vxor.u32 %v845, 2147483648
        %v1033 = vxor.u32 %v847, 2147483648
        %v1034 = vxor.u32 %v958, 2147483648
        %v1035 = vxor.u32 %v960, 2147483648
        %v1036 = vxor.u32 %v849, 2147483648
        %v1037 = vxor.u32 %v851, 2147483648
        %v1038 = vxor.u32 %v962, 2147483648
        %v1039 = vxor.u32 %v964, 2147483648
        %v1040 = vxor.u32 %v855, 2147483648
        %v1041 = vxor.u32 %v857, 2147483648
        %v1042 = vxor.u32 %v968, 2147483648
        %v1043 = vxor.u32 %v970, 2147483648
        %v1044 = vxor.u32 %v859, 2147483648
        %v1045 = vxor.u32 %v861, 2147483648
        %v1046 = vxor.u32 %v972, 2147483648
        %v1047 = vxor.u32 %v974, 2147483648
        %v1048 = vxor.u32 %v865, 2147483648
        %v1049 = vxor.u32 %v867, 2147483648
        %v1050 = vxor.u32 %v978, 2147483648
        %v1051 = vxor.u32 %v980, 2147483648
        %v1052 = vxor.u32 %v869, 2147483648
        %v1053 = vxor.u32 %v871, 2147483648
        %v1054 = vxor.u32 %v982, 2147483648
        %v1055 = vxor.u32 %v984, 2147483648
        %v1056 = vxor.u32 %v875, 2147483648
        %v1057 = vxor.u32 %v877, 2147483648
        %v1058 = vxor.u32 %v988, 2147483648
        %v1059 = vxor.u32 %v990, 2147483648
        %v1060 = vxor.u32 %v879, 2147483648
        %v1061 = vxor.u32 %v881, 2147483648
        %v1062 = vxor.u32 %v992, 2147483648
        %v1063 = vxor.u32 %v994, 2147483648
        %v1064 = vxor.u32 %v885, 2147483648
        %v1065 = vxor.u32 %v887, 2147483648
        %v1066 = vxor.u32 %v998, 2147483648
        %v1067 = vxor.u32 %v1000, 2147483648
        %v1068 = vxor.u32 %v889, 2147483648
        %v1069 = vxor.u32 %v891, 2147483648
        %v1070 = vxor.u32 %v1002, 2147483648
        %v1071 = vxor.u32 %v1004, 2147483648
        %v1072 = vxor.u32 %v895, 2147483648
        %v1073 = vxor.u32 %v897, 2147483648
        %v1074 = vxor.u32 %v1008, 2147483648
        %v1075 = vxor.u32 %v1010, 2147483648
        %v1076 = vxor.u32 %v899, 2147483648
        %v1077 = vxor.u32 %v901, 2147483648
        %v1078 = vxor.u32 %v1012, 2147483648
        %v1079 = vxor.u32 %v1014, 2147483648
        %v1080 = vmul.f32 %v1016, 1.442695
        %v1081 = vpow.pop %v1080
        %v1082 = vmul.f32 %v1017, 1.442695
        %v1083 = vpow.pop %v1082
        %v1084 = vmul.f32 %v1018, 1.442695
        %v1085 = vpow.pop %v1084
        %v1086 = vmul.f32 %v1019, 1.442695
        %v1087 = vpow.pop %v1086
        %v1088 = vmul.f32 %v1020, 1.442695
        %v1089 = vpow.pop %v1088
        %v1090 = vmul.f32 %v1021, 1.442695
        %v1091 = vpow.pop %v1090
        %v1092 = vmul.f32 %v1022, 1.442695
        %v1093 = vpow.pop %v1092
        %v1094 = vmul.f32 %v1023, 1.442695
        %v1095 = vpow.pop %v1094
        %v1096 = vmul.f32 %v1024, 1.442695
        %v1097 = vpow.pop %v1096
        %v1098 = vmul.f32 %v1025, 1.442695
        %v1099 = vpow.pop %v1098
        %v1100 = vmul.f32 %v1026, 1.442695
        %v1101 = vpow.pop %v1100
        %v1102 = vmul.f32 %v1027, 1.442695
        %v1103 = vpow.pop %v1102
        %v1104 = vmul.f32 %v1028, 1.442695
        %v1105 = vpow.pop %v1104
        %v1106 = vmul.f32 %v1029, 1.442695
        %v1107 = vpow.pop %v1106
        %v1108 = vmul.f32 %v1030, 1.442695
        %v1109 = vpow.pop %v1108
        %v1110 = vmul.f32 %v1031, 1.442695
        %v1111 = vpow.pop %v1110
        %v1112 = vmul.f32 %v1032, 1.442695
        %v1113 = vpow.pop %v1112
        %v1114 = vmul.f32 %v1033, 1.442695
        %v1115 = vpow.pop %v1114
        %v1116 = vmul.f32 %v1034, 1.442695
        %v1117 = vpow.pop %v1116
        %v1118 = vmul.f32 %v1035, 1.442695
        %v1119 = vpow.pop %v1118
        %v1120 = vmul.f32 %v1036, 1.442695
        %v1121 = vpow.pop %v1120
        %v1122 = vmul.f32 %v1037, 1.442695
        %v1123 = vpow.pop %v1122
        %v1124 = vmul.f32 %v1038, 1.442695
        %v1125 = vpow.pop %v1124
        %v1126 = vmul.f32 %v1039, 1.442695
        %v1127 = vpow.pop %v1126
        %v1128 = vmul.f32 %v1040, 1.442695
        %v1129 = vpow.pop %v1128
        %v1130 = vmul.f32 %v1041, 1.442695
        %v1131 = vpow.pop %v1130
        %v1132 = vmul.f32 %v1042, 1.442695
        %v1133 = vpow.pop %v1132
        %v1134 = vmul.f32 %v1043, 1.442695
        %v1135 = vpow.pop %v1134
        %v1136 = vmul.f32 %v1044, 1.442695
        %v1137 = vpow.pop %v1136
        %v1138 = vmul.f32 %v1045, 1.442695
        %v1139 = vpow.pop %v1138
        %v1140 = vmul.f32 %v1046, 1.442695
        %v1141 = vpow.pop %v1140
        %v1142 = vmul.f32 %v1047, 1.442695
        %v1143 = vpow.pop %v1142
        %v1144 = vmul.f32 %v1048, 1.442695
        %v1145 = vpow.pop %v1144
        %v1146 = vmul.f32 %v1049, 1.442695
        %v1147 = vpow.pop %v1146
        %v1148 = vmul.f32 %v1050, 1.442695
        %v1149 = vpow.pop %v1148
        %v1150 = vmul.f32 %v1051, 1.442695
        %v1151 = vpow.pop %v1150
        %v1152 = vmul.f32 %v1052, 1.442695
        %v1153 = vpow.pop %v1152
        %v1154 = vmul.f32 %v1053, 1.442695
        %v1155 = vpow.pop %v1154
        %v1156 = vmul.f32 %v1054, 1.442695
        %v1157 = vpow.pop %v1156
        %v1158 = vmul.f32 %v1055, 1.442695
        %v1159 = vpow.pop %v1158
        %v1160 = vmul.f32 %v1056, 1.442695
        %v1161 = vpow.pop %v1160
        %v1162 = vmul.f32 %v1057, 1.442695
        %v1163 = vpow.pop %v1162
        %v1164 = vmul.f32 %v1058, 1.442695
        %v1165 = vpow.pop %v1164
        %v1166 = vmul.f32 %v1059, 1.442695
        %v1167 = vpow.pop %v1166
        %v1168 = vmul.f32 %v1060, 1.442695
        %v1169 = vpow.pop %v1168
        %v1170 = vmul.f32 %v1061, 1.442695
        %v1171 = vpow.pop %v1170
        %v1172 = vmul.f32 %v1062, 1.442695
        %v1173 = vpow.pop %v1172
        %v1174 = vmul.f32 %v1063, 1.442695
        %v1175 = vpow.pop %v1174
        %v1176 = vmul.f32 %v1064, 1.442695
        %v1177 = vpow.pop %v1176
        %v1178 = vmul.f32 %v1065, 1.442695
        %v1179 = vpow.pop %v1178
        %v1180 = vmul.f32 %v1066, 1.442695
        %v1181 = vpow.pop %v1180
        %v1182 = vmul.f32 %v1067, 1.442695
        %v1183 = vpow.pop %v1182
        %v1184 = vmul.f32 %v1068, 1.442695
        %v1185 = vpow.pop %v1184
        %v1186 = vmul.f32 %v1069, 1.442695
        %v1187 = vpow.pop %v1186
        %v1188 = vmul.f32 %v1070, 1.442695
        %v1189 = vpow.pop %v1188
        %v1190 = vmul.f32 %v1071, 1.442695
        %v1191 = vpow.pop %v1190
        %v1192 = vmul.f32 %v1072, 1.442695
        %v1193 = vpow.pop %v1192
        %v1194 = vmul.f32 %v1073, 1.442695
        %v1195 = vpow.pop %v1194
        %v1196 = vmul.f32 %v1074, 1.442695
        %v1197 = vpow.pop %v1196
        %v1198 = vmul.f32 %v1075, 1.442695
        %v1199 = vpow.pop %v1198
        %v1200 = vmul.f32 %v1076, 1.442695
        %v1201 = vpow.pop %v1200
        %v1202 = vmul.f32 %v1077, 1.442695
        %v1203 = vpow.pop %v1202
        %v1204 = vmul.f32 %v1078, 1.442695
        %v1205 = vpow.pop %v1204
        %v1206 = vmul.f32 %v1079, 1.442695
        %v1207 = vpow.pop %v1206
        %v1208 = vadd.f32 %v1081, 1.0
        %v1209 = vadd.f32 %v1083, 1.0
        %v1210 = vadd.f32 %v1085, 1.0
        %v1211 = vadd.f32 %v1087, 1.0
        %v1212 = vadd.f32 %v1089, 1.0
        %v1213 = vadd.f32 %v1091, 1.0
        %v1214 = vadd.f32 %v1093, 1.0
        %v1215 = vadd.f32 %v1095, 1.0
        %v1216 = vadd.f32 %v1097, 1.0
        %v1217 = vadd.f32 %v1099, 1.0
        %v1218 = vadd.f32 %v1101, 1.0
        %v1219 = vadd.f32 %v1103, 1.0
        %v1220 = vadd.f32 %v1105, 1.0
        %v1221 = vadd.f32 %v1107, 1.0
        %v1222 = vadd.f32 %v1109, 1.0
        %v1223 = vadd.f32 %v1111, 1.0
        %v1224 = vadd.f32 %v1113, 1.0
        %v1225 = vadd.f32 %v1115, 1.0
        %v1226 = vadd.f32 %v1117, 1.0
        %v1227 = vadd.f32 %v1119, 1.0
        %v1228 = vadd.f32 %v1121, 1.0
        %v1229 = vadd.f32 %v1123, 1.0
        %v1230 = vadd.f32 %v1125, 1.0
        %v1231 = vadd.f32 %v1127, 1.0
        %v1232 = vadd.f32 %v1129, 1.0
        %v1233 = vadd.f32 %v1131, 1.0
        %v1234 = vadd.f32 %v1133, 1.0
        %v1235 = vadd.f32 %v1135, 1.0
        %v1236 = vadd.f32 %v1137, 1.0
        %v1237 = vadd.f32 %v1139, 1.0
        %v1238 = vadd.f32 %v1141, 1.0
        %v1239 = vadd.f32 %v1143, 1.0
        %v1240 = vadd.f32 %v1145, 1.0
        %v1241 = vadd.f32 %v1147, 1.0
        %v1242 = vadd.f32 %v1149, 1.0
        %v1243 = vadd.f32 %v1151, 1.0
        %v1244 = vadd.f32 %v1153, 1.0
        %v1245 = vadd.f32 %v1155, 1.0
        %v1246 = vadd.f32 %v1157, 1.0
        %v1247 = vadd.f32 %v1159, 1.0
        %v1248 = vadd.f32 %v1161, 1.0
        %v1249 = vadd.f32 %v1163, 1.0
        %v1250 = vadd.f32 %v1165, 1.0
        %v1251 = vadd.f32 %v1167, 1.0
        %v1252 = vadd.f32 %v1169, 1.0
        %v1253 = vadd.f32 %v1171, 1.0
        %v1254 = vadd.f32 %v1173, 1.0
        %v1255 = vadd.f32 %v1175, 1.0
        %v1256 = vadd.f32 %v1177, 1.0
        %v1257 = vadd.f32 %v1179, 1.0
        %v1258 = vadd.f32 %v1181, 1.0
        %v1259 = vadd.f32 %v1183, 1.0
        %v1260 = vadd.f32 %v1185, 1.0
        %v1261 = vadd.f32 %v1187, 1.0
        %v1262 = vadd.f32 %v1189, 1.0
        %v1263 = vadd.f32 %v1191, 1.0
        %v1264 = vadd.f32 %v1193, 1.0
        %v1265 = vadd.f32 %v1195, 1.0
        %v1266 = vadd.f32 %v1197, 1.0
        %v1267 = vadd.f32 %v1199, 1.0
        %v1268 = vadd.f32 %v1201, 1.0
        %v1269 = vadd.f32 %v1203, 1.0
        %v1270 = vadd.f32 %v1205, 1.0
        %v1271 = vadd.f32 %v1207, 1.0
        %v1272 = vrcp.pop %v1208
        %v1273 = vmul.f32 1.0, %v1272
        %v1274 = vrcp.pop %v1209
        %v1275 = vmul.f32 1.0, %v1274
        %v1276 = vrcp.pop %v1210
        %v1277 = vmul.f32 1.0, %v1276
        %v1278 = vrcp.pop %v1211
        %v1279 = vmul.f32 1.0, %v1278
        %v1280 = vrcp.pop %v1212
        %v1281 = vmul.f32 1.0, %v1280
        %v1282 = vrcp.pop %v1213
        %v1283 = vmul.f32 1.0, %v1282
        %v1284 = vrcp.pop %v1214
        %v1285 = vmul.f32 1.0, %v1284
        %v1286 = vrcp.pop %v1215
        %v1287 = vmul.f32 1.0, %v1286
        %v1288 = vrcp.pop %v1216
        %v1289 = vmul.f32 1.0, %v1288
        %v1290 = vrcp.pop %v1217
        %v1291 = vmul.f32 1.0, %v1290
        %v1292 = vrcp.pop %v1218
        %v1293 = vmul.f32 1.0, %v1292
        %v1294 = vrcp.pop %v1219
        %v1295 = vmul.f32 1.0, %v1294
        %v1296 = vrcp.pop %v1220
        %v1297 = vmul.f32 1.0, %v1296
        %v1298 = vrcp.pop %v1221
        %v1299 = vmul.f32 1.0, %v1298
        %v1300 = vrcp.pop %v1222
        %v1301 = vmul.f32 1.0, %v1300
        %v1302 = vrcp.pop %v1223
        %v1303 = vmul.f32 1.0, %v1302
        %v1304 = vrcp.pop %v1224
        %v1305 = vmul.f32 1.0, %v1304
        %v1306 = vrcp.pop %v1225
        %v1307 = vmul.f32 1.0, %v1306
        %v1308 = vrcp.pop %v1226
        %v1309 = vmul.f32 1.0, %v1308
        %v1310 = vrcp.pop %v1227
        %v1311 = vmul.f32 1.0, %v1310
        %v1312 = vrcp.pop %v1228
        %v1313 = vmul.f32 1.0, %v1312
        %v1314 = vrcp.pop %v1229
        %v1315 = vmul.f32 1.0, %v1314
        %v1316 = vrcp.pop %v1230
        %v1317 = vmul.f32 1.0, %v1316
        %v1318 = vrcp.pop %v1231
        %v1319 = vmul.f32 1.0, %v1318
        %v1320 = vrcp.pop %v1232
        %v1321 = vmul.f32 1.0, %v1320
        %v1322 = vrcp.pop %v1233
        %v1323 = vmul.f32 1.0, %v1322
        %v1324 = vrcp.pop %v1234
        %v1325 = vmul.f32 1.0, %v1324
        %v1326 = vrcp.pop %v1235
        %v1327 = vmul.f32 1.0, %v1326
        %v1328 = vrcp.pop %v1236
        %v1329 = vmul.f32 1.0, %v1328
        %v1330 = vrcp.pop %v1237
        %v1331 = vmul.f32 1.0, %v1330
        %v1332 = vrcp.pop %v1238
        %v1333 = vmul.f32 1.0, %v1332
        %v1334 = vrcp.pop %v1239
        %v1335 = vmul.f32 1.0, %v1334
        %v1336 = vrcp.pop %v1240
        %v1337 = vmul.f32 1.0, %v1336
        %v1338 = vrcp.pop %v1241
        %v1339 = vmul.f32 1.0, %v1338
        %v1340 = vrcp.pop %v1242
        %v1341 = vmul.f32 1.0, %v1340
        %v1342 = vrcp.pop %v1243
        %v1343 = vmul.f32 1.0, %v1342
        %v1344 = vrcp.pop %v1244
        %v1345 = vmul.f32 1.0, %v1344
        %v1346 = vrcp.pop %v1245
        %v1347 = vmul.f32 1.0, %v1346
        %v1348 = vrcp.pop %v1246
        %v1349 = vmul.f32 1.0, %v1348
        %v1350 = vrcp.pop %v1247
        %v1351 = vmul.f32 1.0, %v1350
        %v1352 = vrcp.pop %v1248
        %v1353 = vmul.f32 1.0, %v1352
        %v1354 = vrcp.pop %v1249
        %v1355 = vmul.f32 1.0, %v1354
        %v1356 = vrcp.pop %v1250
        %v1357 = vmul.f32 1.0, %v1356
        %v1358 = vrcp.pop %v1251
        %v1359 = vmul.f32 1.0, %v1358
        %v1360 = vrcp.pop %v1252
        %v1361 = vmul.f32 1.0, %v1360
        %v1362 = vrcp.pop %v1253
        %v1363 = vmul.f32 1.0, %v1362
        %v1364 = vrcp.pop %v1254
        %v1365 = vmul.f32 1.0, %v1364
        %v1366 = vrcp.pop %v1255
        %v1367 = vmul.f32 1.0, %v1366
        %v1368 = vrcp.pop %v1256
        %v1369 = vmul.f32 1.0, %v1368
        %v1370 = vrcp.pop %v1257
        %v1371 = vmul.f32 1.0, %v1370
        %v1372 = vrcp.pop %v1258
        %v1373 = vmul.f32 1.0, %v1372
        %v1374 = vrcp.pop %v1259
        %v1375 = vmul.f32 1.0, %v1374
        %v1376 = vrcp.pop %v1260
        %v1377 = vmul.f32 1.0, %v1376
        %v1378 = vrcp.pop %v1261
        %v1379 = vmul.f32 1.0, %v1378
        %v1380 = vrcp.pop %v1262
        %v1381 = vmul.f32 1.0, %v1380
        %v1382 = vrcp.pop %v1263
        %v1383 = vmul.f32 1.0, %v1382
        %v1384 = vrcp.pop %v1264
        %v1385 = vmul.f32 1.0, %v1384
        %v1386 = vrcp.pop %v1265
        %v1387 = vmul.f32 1.0, %v1386
        %v1388 = vrcp.pop %v1266
        %v1389 = vmul.f32 1.0, %v1388
        %v1390 = vrcp.pop %v1267
        %v1391 = vmul.f32 1.0, %v1390
        %v1392 = vrcp.pop %v1268
        %v1393 = vmul.f32 1.0, %v1392
        %v1394 = vrcp.pop %v1269
        %v1395 = vmul.f32 1.0, %v1394
        %v1396 = vrcp.pop %v1270
        %v1397 = vmul.f32 1.0, %v1396
        %v1398 = vrcp.pop %v1271
        %v1399 = vmul.f32 1.0, %v1398
        %v1400 = vmul.f32 %v825, %v1273
        %v1401 = vmul.f32 %v827, %v1275
        %v1402 = vmul.f32 %v938, %v1277
        %v1403 = vmul.f32 %v940, %v1279
        %v1404 = vmul.f32 %v829, %v1281
        %v1405 = vmul.f32 %v831, %v1283
        %v1406 = vmul.f32 %v942, %v1285
        %v1407 = vmul.f32 %v944, %v1287
        %v1408 = vmul.f32 %v835, %v1289
        %v1409 = vmul.f32 %v837, %v1291
        %v1410 = vmul.f32 %v948, %v1293
        %v1411 = vmul.f32 %v950, %v1295
        %v1412 = vmul.f32 %v839, %v1297
        %v1413 = vmul.f32 %v841, %v1299
        %v1414 = vmul.f32 %v952, %v1301
        %v1415 = vmul.f32 %v954, %v1303
        %v1416 = vmul.f32 %v845, %v1305
        %v1417 = vmul.f32 %v847, %v1307
        %v1418 = vmul.f32 %v958, %v1309
        %v1419 = vmul.f32 %v960, %v1311
        %v1420 = vmul.f32 %v849, %v1313
        %v1421 = vmul.f32 %v851, %v1315
        %v1422 = vmul.f32 %v962, %v1317
        %v1423 = vmul.f32 %v964, %v1319
        %v1424 = vmul.f32 %v855, %v1321
        %v1425 = vmul.f32 %v857, %v1323
        %v1426 = vmul.f32 %v968, %v1325
        %v1427 = vmul.f32 %v970, %v1327
        %v1428 = vmul.f32 %v859, %v1329
        %v1429 = vmul.f32 %v861, %v1331
        %v1430 = vmul.f32 %v972, %v1333
        %v1431 = vmul.f32 %v974, %v1335
        %v1432 = vmul.f32 %v865, %v1337
        %v1433 = vmul.f32 %v867, %v1339
        %v1434 = vmul.f32 %v978, %v1341
        %v1435 = vmul.f32 %v980, %v1343
        %v1436 = vmul.f32 %v869, %v1345
        %v1437 = vmul.f32 %v871, %v1347
        %v1438 = vmul.f32 %v982, %v1349
        %v1439 = vmul.f32 %v984, %v1351
        %v1440 = vmul.f32 %v875, %v1353
        %v1441 = vmul.f32 %v877, %v1355
        %v1442 = vmul.f32 %v988, %v1357
        %v1443 = vmul.f32 %v990, %v1359
        %v1444 = vmul.f32 %v879, %v1361
        %v1445 = vmul.f32 %v881, %v1363
        %v1446 = vmul.f32 %v992, %v1365
        %v1447 = vmul.f32 %v994, %v1367
        %v1448 = vmul.f32 %v885, %v1369
        %v1449 = vmul.f32 %v887, %v1371
        %v1450 = vmul.f32 %v998, %v1373
        %v1451 = vmul.f32 %v1000, %v1375
        %v1452 = vmul.f32 %v889, %v1377
        %v1453 = vmul.f32 %v891, %v1379
        %v1454 = vmul.f32 %v1002, %v1381
        %v1455 = vmul.f32 %v1004, %v1383
        %v1456 = vmul.f32 %v895, %v1385
        %v1457 = vmul.f32 %v897, %v1387
        %v1458 = vmul.f32 %v1008, %v1389
        %v1459 = vmul.f32 %v1010, %v1391
        %v1460 = vmul.f32 %v899, %v1393
        %v1461 = vmul.f32 %v901, %v1395
        %v1462 = vmul.f32 %v1012, %v1397
        %v1463 = vmul.f32 %v1014, %v1399
        %v1464 = vpack.c.bf16 %v1404, %v1400
        %v1465 = vpack.c.bf16 %v1405, %v1401
        %v1466 = vpack.c.bf16 %v1406, %v1402
        %v1467 = vpack.c.bf16 %v1407, %v1403
        %v1468 = vpack.c.bf16 %v1412, %v1408
        %v1469 = vpack.c.bf16 %v1413, %v1409
        %v1470 = vpack.c.bf16 %v1414, %v1410
        %v1471 = vpack.c.bf16 %v1415, %v1411
        %v1472 = vpack.c.bf16 %v1420, %v1416
        %v1473 = vpack.c.bf16 %v1421, %v1417
        %v1474 = vpack.c.bf16 %v1422, %v1418
        %v1475 = vpack.c.bf16 %v1423, %v1419
        %v1476 = vpack.c.bf16 %v1428, %v1424
        %v1477 = vpack.c.bf16 %v1429, %v1425
        %v1478 = vpack.c.bf16 %v1430, %v1426
        %v1479 = vpack.c.bf16 %v1431, %v1427
        %v1480 = vpack.c.bf16 %v1436, %v1432
        %v1481 = vpack.c.bf16 %v1437, %v1433
        %v1482 = vpack.c.bf16 %v1438, %v1434
        %v1483 = vpack.c.bf16 %v1439, %v1435
        %v1484 = vpack.c.bf16 %v1444, %v1440
        %v1485 = vpack.c.bf16 %v1445, %v1441
        %v1486 = vpack.c.bf16 %v1446, %v1442
        %v1487 = vpack.c.bf16 %v1447, %v1443
        %v1488 = vpack.c.bf16 %v1452, %v1448
        %v1489 = vpack.c.bf16 %v1453, %v1449
        %v1490 = vpack.c.bf16 %v1454, %v1450
        %v1491 = vpack.c.bf16 %v1455, %v1451
        %v1492 = vpack.c.bf16 %v1460, %v1456
        %v1493 = vpack.c.bf16 %v1461, %v1457
        %v1494 = vpack.c.bf16 %v1462, %v1458
        %v1495 = vpack.c.bf16 %v1463, %v1459
        %v1496 = vld [vmem:[#allocation7] sm:$0xf]
        %v1497 = vld [vmem:[#allocation7 + $0x4] sm:$0xf]
        %v1498 = vld [vmem:[#allocation7 + $0x8] sm:$0xf]
        %v1499 = vld [vmem:[#allocation7 + $0xc] sm:$0xf]
        %v1500 = vld [vmem:[#allocation7 + $0x10] sm:$0xf]
        %v1501 = vld [vmem:[#allocation7 + $0x14] sm:$0xf]
        %v1502 = vld [vmem:[#allocation7 + $0x18] sm:$0xf]
        %v1503 = vld [vmem:[#allocation7 + $0x1c] sm:$0xf]
        %v1504 = vld [vmem:[#allocation7 + $0x20] sm:$0xf]
        %v1505 = vld [vmem:[#allocation7 + $0x24] sm:$0xf]
        %v1506 = vld [vmem:[#allocation7 + $0x28] sm:$0xf]
        %v1507 = vld [vmem:[#allocation7 + $0x2c] sm:$0xf]
        %v1508 = vld [vmem:[#allocation7 + $0x30] sm:$0xf]
        %v1509 = vld [vmem:[#allocation7 + $0x34] sm:$0xf]
        %v1510 = vld [vmem:[#allocation7 + $0x38] sm:$0xf]
        %v1511 = vld [vmem:[#allocation7 + $0x3c] sm:$0xf]
        %v1512 = vld [vmem:[#allocation7 + $0x40] sm:$0xf]
        %v1513 = vld [vmem:[#allocation7 + $0x44] sm:$0xf]
        %v1514 = vld [vmem:[#allocation7 + $0x48] sm:$0xf]
        %v1515 = vld [vmem:[#allocation7 + $0x4c] sm:$0xf]
        %v1516 = vld [vmem:[#allocation7 + $0x50] sm:$0xf]
        %v1517 = vld [vmem:[#allocation7 + $0x54] sm:$0xf]
        %v1518 = vld [vmem:[#allocation7 + $0x58] sm:$0xf]
        %v1519 = vld [vmem:[#allocation7 + $0x5c] sm:$0xf]
        %v1520 = vld [vmem:[#allocation7 + $0x60] sm:$0xf]
        %v1521 = vld [vmem:[#allocation7 + $0x64] sm:$0xf]
        %v1522 = vld [vmem:[#allocation7 + $0x68] sm:$0xf]
        %v1523 = vld [vmem:[#allocation7 + $0x6c] sm:$0xf]
        %v1524 = vld [vmem:[#allocation7 + $0x70] sm:$0xf]
        %v1525 = vld [vmem:[#allocation7 + $0x74] sm:$0xf]
        %v1526 = vld [vmem:[#allocation7 + $0x78] sm:$0xf]
        %v1527 = vld [vmem:[#allocation7 + $0x7c] sm:$0xf]
        %v1528 = vld [vmem:[#allocation7 + $0x80] sm:$0xf]
        %v1529 = vld [vmem:[#allocation7 + $0x84] sm:$0xf]
        %v1530 = vld [vmem:[#allocation7 + $0x88] sm:$0xf]
        %v1531 = vld [vmem:[#allocation7 + $0x8c] sm:$0xf]
        %v1532 = vld [vmem:[#allocation7 + $0x90] sm:$0xf]
        %v1533 = vld [vmem:[#allocation7 + $0x94] sm:$0xf]
        %v1534 = vld [vmem:[#allocation7 + $0x98] sm:$0xf]
        %v1535 = vld [vmem:[#allocation7 + $0x9c] sm:$0xf]
        %v1536 = vld [vmem:[#allocation7 + $0xa0] sm:$0xf]
        %v1537 = vld [vmem:[#allocation7 + $0xa4] sm:$0xf]
        %v1538 = vld [vmem:[#allocation7 + $0xa8] sm:$0xf]
        %v1539 = vld [vmem:[#allocation7 + $0xac] sm:$0xf]
        %v1540 = vld [vmem:[#allocation7 + $0xb0] sm:$0xf]
        %v1541 = vld [vmem:[#allocation7 + $0xb4] sm:$0xf]
        %v1542 = vld [vmem:[#allocation7 + $0xb8] sm:$0xf]
        %v1543 = vld [vmem:[#allocation7 + $0xbc] sm:$0xf]
        %v1544 = vld [vmem:[#allocation7 + $0xc0] sm:$0xf]
        %v1545 = vld [vmem:[#allocation7 + $0xc4] sm:$0xf]
        %v1546 = vld [vmem:[#allocation7 + $0xc8] sm:$0xf]
        %v1547 = vld [vmem:[#allocation7 + $0xcc] sm:$0xf]
        %v1548 = vld [vmem:[#allocation7 + $0xd0] sm:$0xf]
        %v1549 = vld [vmem:[#allocation7 + $0xd4] sm:$0xf]
        %v1550 = vld [vmem:[#allocation7 + $0xd8] sm:$0xf]
        %v1551 = vld [vmem:[#allocation7 + $0xdc] sm:$0xf]
        %v1552 = vld [vmem:[#allocation7 + $0xe0] sm:$0xf]
        %v1553 = vld [vmem:[#allocation7 + $0xe4] sm:$0xf]
        %v1554 = vld [vmem:[#allocation7 + $0xe8] sm:$0xf]
        %v1555 = vld [vmem:[#allocation7 + $0xec] sm:$0xf]
        %v1556 = vld [vmem:[#allocation7 + $0xf0] sm:$0xf]
        %v1557 = vld [vmem:[#allocation7 + $0xf4] sm:$0xf]
        %v1558 = vld [vmem:[#allocation7 + $0xf8] sm:$0xf]
        %v1559 = vld [vmem:[#allocation7 + $0xfc] sm:$0xf]
        %v1560 = vld [vmem:[%s6] sm:$0x1]
        %v1562 = vlaneseq
        %v1563 = vshrl.u32 %v1562, 7
        %v1564 = vsub.s32 0, %v1563
        %v1565 = vrot.slane %v1560, %v1564
        %v1631 = vunpack.c.l.b16 %v1496
        %v1632 = vunpack.c.l.b16 %v1497
        %v1633 = vunpack.c.l.b16 %v1498
        %v1634 = vunpack.c.l.b16 %v1499
        %v1635 = vunpack.c.l.b16 %v1500
        %v1636 = vunpack.c.l.b16 %v1501
        %v1637 = vunpack.c.l.b16 %v1502
        %v1638 = vunpack.c.l.b16 %v1503
        %v1639 = vunpack.c.l.b16 %v1504
        %v1640 = vunpack.c.l.b16 %v1505
        %v1641 = vunpack.c.l.b16 %v1506
        %v1642 = vunpack.c.l.b16 %v1507
        %v1643 = vunpack.c.l.b16 %v1508
        %v1644 = vunpack.c.l.b16 %v1509
        %v1645 = vunpack.c.l.b16 %v1510
        %v1646 = vunpack.c.l.b16 %v1511
        %v1647 = vunpack.c.l.b16 %v1512
        %v1648 = vunpack.c.l.b16 %v1513
        %v1649 = vunpack.c.l.b16 %v1514
        %v1650 = vunpack.c.l.b16 %v1515
        %v1651 = vunpack.c.l.b16 %v1516
        %v1652 = vunpack.c.l.b16 %v1517
        %v1653 = vunpack.c.l.b16 %v1518
        %v1654 = vunpack.c.l.b16 %v1519
        %v1655 = vunpack.c.l.b16 %v1520
        %v1656 = vunpack.c.l.b16 %v1521
        %v1657 = vunpack.c.l.b16 %v1522
        %v1658 = vunpack.c.l.b16 %v1523
        %v1659 = vunpack.c.l.b16 %v1524
        %v1660 = vunpack.c.l.b16 %v1525
        %v1661 = vunpack.c.l.b16 %v1526
        %v1662 = vunpack.c.l.b16 %v1527
        %v1663 = vunpack.c.l.b16 %v1528
        %v1664 = vunpack.c.l.b16 %v1529
        %v1665 = vunpack.c.l.b16 %v1530
        %v1666 = vunpack.c.l.b16 %v1531
        %v1667 = vunpack.c.l.b16 %v1532
        %v1668 = vunpack.c.l.b16 %v1533
        %v1669 = vunpack.c.l.b16 %v1534
        %v1670 = vunpack.c.l.b16 %v1535
        %v1671 = vunpack.c.l.b16 %v1536
        %v1672 = vunpack.c.l.b16 %v1537
        %v1673 = vunpack.c.l.b16 %v1538
        %v1674 = vunpack.c.l.b16 %v1539
        %v1675 = vunpack.c.l.b16 %v1540
        %v1676 = vunpack.c.l.b16 %v1541
        %v1677 = vunpack.c.l.b16 %v1542
        %v1678 = vunpack.c.l.b16 %v1543
        %v1679 = vunpack.c.l.b16 %v1544
        %v1680 = vunpack.c.l.b16 %v1545
        %v1681 = vunpack.c.l.b16 %v1546
        %v1682 = vunpack.c.l.b16 %v1547
        %v1683 = vunpack.c.l.b16 %v1548
        %v1684 = vunpack.c.l.b16 %v1549
        %v1685 = vunpack.c.l.b16 %v1550
        %v1686 = vunpack.c.l.b16 %v1551
        %v1687 = vunpack.c.l.b16 %v1552
        %v1688 = vunpack.c.l.b16 %v1553
        %v1689 = vunpack.c.l.b16 %v1554
        %v1690 = vunpack.c.l.b16 %v1555
        %v1691 = vunpack.c.l.b16 %v1556
        %v1692 = vunpack.c.l.b16 %v1557
        %v1693 = vunpack.c.l.b16 %v1558
        %v1694 = vunpack.c.l.b16 %v1559
        %v1695 = vpack.c.b16 %v1632, %v1631
        %v1696 = vpack.c.b16 %v1634, %v1633
        %v1697 = vpack.c.b16 %v1636, %v1635
        %v1698 = vpack.c.b16 %v1638, %v1637
        %v1699 = vpack.c.b16 %v1640, %v1639
        %v1700 = vpack.c.b16 %v1642, %v1641
        %v1701 = vpack.c.b16 %v1644, %v1643
        %v1702 = vpack.c.b16 %v1646, %v1645
        %v1703 = vpack.c.b16 %v1648, %v1647
        %v1704 = vpack.c.b16 %v1650, %v1649
        %v1705 = vpack.c.b16 %v1652, %v1651
        %v1706 = vpack.c.b16 %v1654, %v1653
        %v1707 = vpack.c.b16 %v1656, %v1655
        %v1708 = vpack.c.b16 %v1658, %v1657
        %v1709 = vpack.c.b16 %v1660, %v1659
        %v1710 = vpack.c.b16 %v1662, %v1661
        %v1711 = vpack.c.b16 %v1664, %v1663
        %v1712 = vpack.c.b16 %v1666, %v1665
        %v1713 = vpack.c.b16 %v1668, %v1667
        %v1714 = vpack.c.b16 %v1670, %v1669
        %v1715 = vpack.c.b16 %v1672, %v1671
        %v1716 = vpack.c.b16 %v1674, %v1673
        %v1717 = vpack.c.b16 %v1676, %v1675
        %v1718 = vpack.c.b16 %v1678, %v1677
        %v1719 = vpack.c.b16 %v1680, %v1679
        %v1720 = vpack.c.b16 %v1682, %v1681
        %v1721 = vpack.c.b16 %v1684, %v1683
        %v1722 = vpack.c.b16 %v1686, %v1685
        %v1723 = vpack.c.b16 %v1688, %v1687
        %v1724 = vpack.c.b16 %v1690, %v1689
        %v1725 = vpack.c.b16 %v1692, %v1691
        %v1726 = vpack.c.b16 %v1694, %v1693
        %1759 = vmatprep.subr.bf16.mxu0 0
        %1760 = vmatpush1.bf16.msra.mxu0 %v1695
        %1761 = vmatprep.subr.bf16.mxu0 0
        %1762 = vmatpush1.bf16.msra.mxu0 %v1696
        %1763 = vmatprep.subr.bf16.mxu0 0
        %1764 = vmatpush1.bf16.msra.mxu0 %v1697
        %1765 = vmatprep.subr.bf16.mxu0 0
        %1766 = vmatpush1.bf16.msra.mxu0 %v1698
        %1767 = vmatprep.subr.bf16.mxu0 0
        %1768 = vmatpush1.bf16.msra.mxu0 %v1699
        %1769 = vmatprep.subr.bf16.mxu0 0
        %1770 = vmatpush1.bf16.msra.mxu0 %v1700
        %1771 = vmatprep.subr.bf16.mxu0 0
        %1772 = vmatpush1.bf16.msra.mxu0 %v1701
        %1773 = vmatprep.subr.bf16.mxu0 0
        %1774 = vmatpush1.bf16.msra.mxu0 %v1702
        %1775 = vmatprep.subr.bf16.mxu0 0
        %1776 = vmatpush1.bf16.msra.mxu0 %v1703
        %1777 = vmatprep.subr.bf16.mxu0 0
        %1778 = vmatpush1.bf16.msra.mxu0 %v1704
        %1779 = vmatprep.subr.bf16.mxu0 0
        %1780 = vmatpush1.bf16.msra.mxu0 %v1705
        %1781 = vmatprep.subr.bf16.mxu0 0
        %1782 = vmatpush1.bf16.msra.mxu0 %v1706
        %1783 = vmatprep.subr.bf16.mxu0 0
        %1784 = vmatpush1.bf16.msra.mxu0 %v1707
        %1785 = vmatprep.subr.bf16.mxu0 0
        %1786 = vmatpush1.bf16.msra.mxu0 %v1708
        %1787 = vmatprep.subr.bf16.mxu0 0
        %1788 = vmatpush1.bf16.msra.mxu0 %v1709
        %1789 = vmatprep.subr.bf16.mxu0 0
        %1790 = vmatpush1.bf16.msra.mxu0 %v1710
        %1791 = vmatprep.mubr.bf16.mxu0 %v1465
        %1792 = vmatmul.mubr.bf16.gmra.mrb[0].mxu0 %v1464
        %v1793 = vpop.f32.mrb[0].mxu0
        %v1794 = vadd.f32 %v1565, %v1793
        %v1795 = vpop.f32.mrb[0].mxu0
        %v1796 = vpop.f32.mrb[0].mxu0
        %v1797 = vadd.f32 %v1565, %v1796
        %v1798 = vpop.f32.mrb[0].mxu0
        %1799 = vmatprep.mubr.bf16.mxu0 %v1469
        %1800 = vmatmul.mubr.bf16.gmra.mrb[0].mxu0 %v1468
        %v1801 = vpop.f32.mrb[0].mxu0
        %v1802 = vadd.f32 %v1565, %v1801
        %v1803 = vpop.f32.mrb[0].mxu0
        %v1804 = vpop.f32.mrb[0].mxu0
        %v1805 = vadd.f32 %v1565, %v1804
        %v1806 = vpop.f32.mrb[0].mxu0
        %1807 = vmatprep.mubr.bf16.mxu0 %v1473
        %1808 = vmatmul.mubr.bf16.gmra.mrb[0].mxu0 %v1472
        %v1809 = vpop.f32.mrb[0].mxu0
        %v1810 = vadd.f32 %v1565, %v1809
        %v1811 = vpop.f32.mrb[0].mxu0
        %v1812 = vpop.f32.mrb[0].mxu0
        %v1813 = vadd.f32 %v1565, %v1812
        %v1814 = vpop.f32.mrb[0].mxu0
        %1815 = vmatprep.mubr.bf16.mxu0 %v1477
        %1816 = vmatmul.mubr.bf16.gmra.mrb[0].mxu0 %v1476
        %v1817 = vpop.f32.mrb[0].mxu0
        %v1818 = vadd.f32 %v1565, %v1817
        %v1819 = vpop.f32.mrb[0].mxu0
        %v1820 = vpop.f32.mrb[0].mxu0
        %v1821 = vadd.f32 %v1565, %v1820
        %v1822 = vpop.f32.mrb[0].mxu0
        %1823 = vmatprep.mubr.bf16.mxu0 %v1481
        %1824 = vmatmul.mubr.bf16.gmra.mrb[0].mxu0 %v1480
        %v1825 = vpop.f32.mrb[0].mxu0
        %v1826 = vadd.f32 %v1565, %v1825
        %v1827 = vpop.f32.mrb[0].mxu0
        %v1828 = vpop.f32.mrb[0].mxu0
        %v1829 = vadd.f32 %v1565, %v1828
        %v1830 = vpop.f32.mrb[0].mxu0
        %1831 = vmatprep.mubr.bf16.mxu0 %v1485
        %1832 = vmatmul.mubr.bf16.gmra.mrb[0].mxu0 %v1484
        %v1833 = vpop.f32.mrb[0].mxu0
        %v1834 = vadd.f32 %v1565, %v1833
        %v1835 = vpop.f32.mrb[0].mxu0
        %v1836 = vpop.f32.mrb[0].mxu0
        %v1837 = vadd.f32 %v1565, %v1836
        %v1838 = vpop.f32.mrb[0].mxu0
        %1839 = vmatprep.mubr.bf16.mxu0 %v1489
        %1840 = vmatmul.mubr.bf16.gmra.mrb[0].mxu0 %v1488
        %v1841 = vpop.f32.mrb[0].mxu0
        %v1842 = vadd.f32 %v1565, %v1841
        %v1843 = vpop.f32.mrb[0].mxu0
        %v1844 = vpop.f32.mrb[0].mxu0
        %v1845 = vadd.f32 %v1565, %v1844
        %v1846 = vpop.f32.mrb[0].mxu0
        %1847 = vmatprep.mubr.bf16.mxu0 %v1493
        %1848 = vmatmul.mubr.bf16.gmra.mrb[0].mxu0 %v1492
        %v1849 = vpop.f32.mrb[0].mxu0
        %v1850 = vadd.f32 %v1565, %v1849
        %v1851 = vpop.f32.mrb[0].mxu0
        %v1852 = vpop.f32.mrb[0].mxu0
        %v1853 = vadd.f32 %v1565, %v1852
        %v1854 = vpop.f32.mrb[0].mxu0
        %1855 = vdwg.mxu0
        %1856 = vmatprep.subr.bf16.mxu0 0
        %1857 = vmatpush1.bf16.msra.mxu0 %v1711
        %1858 = vmatprep.subr.bf16.mxu0 0
        %1859 = vmatpush1.bf16.msra.mxu0 %v1712
        %1860 = vmatprep.subr.bf16.mxu0 0
        %1861 = vmatpush1.bf16.msra.mxu0 %v1713
        %1862 = vmatprep.subr.bf16.mxu0 0
        %1863 = vmatpush1.bf16.msra.mxu0 %v1714
        %1864 = vmatprep.subr.bf16.mxu0 0
        %1865 = vmatpush1.bf16.msra.mxu0 %v1715
        %1866 = vmatprep.subr.bf16.mxu0 0
        %1867 = vmatpush1.bf16.msra.mxu0 %v1716
        %1868 = vmatprep.subr.bf16.mxu0 0
        %1869 = vmatpush1.bf16.msra.mxu0 %v1717
        %1870 = vmatprep.subr.bf16.mxu0 0
        %1871 = vmatpush1.bf16.msra.mxu0 %v1718
        %1872 = vmatprep.subr.bf16.mxu0 0
        %1873 = vmatpush1.bf16.msra.mxu0 %v1719
        %1874 = vmatprep.subr.bf16.mxu0 0
        %1875 = vmatpush1.bf16.msra.mxu0 %v1720
        %1876 = vmatprep.subr.bf16.mxu0 0
        %1877 = vmatpush1.bf16.msra.mxu0 %v1721
        %1878 = vmatprep.subr.bf16.mxu0 0
        %1879 = vmatpush1.bf16.msra.mxu0 %v1722
        %1880 = vmatprep.subr.bf16.mxu0 0
        %1881 = vmatpush1.bf16.msra.mxu0 %v1723
        %1882 = vmatprep.subr.bf16.mxu0 0
        %1883 = vmatpush1.bf16.msra.mxu0 %v1724
        %1884 = vmatprep.subr.bf16.mxu0 0
        %1885 = vmatpush1.bf16.msra.mxu0 %v1725
        %1886 = vmatprep.subr.bf16.mxu0 0
        %1887 = vmatpush1.bf16.msra.mxu0 %v1726
        %1888 = vmatprep.mubr.bf16.mxu0 %v1467
        %1889 = vmatmul.mubr.bf16.gmra.mrb[0].mxu0 %v1466
        %v1890 = vpop.f32.mrb[0].mxu0
        %v1891 = vadd.f32 %v1794, %v1890
        %v1892 = vpop.f32.mrb[0].mxu0
        %v1893 = vpop.f32.mrb[0].mxu0
        %v1894 = vadd.f32 %v1797, %v1893
        %v1895 = vpop.f32.mrb[0].mxu0
        %1896 = vmatprep.mubr.bf16.mxu0 %v1471
        %1897 = vmatmul.mubr.bf16.gmra.mrb[0].mxu0 %v1470
        %v1898 = vpop.f32.mrb[0].mxu0
        %v1899 = vadd.f32 %v1802, %v1898
        %v1900 = vpop.f32.mrb[0].mxu0
        %v1901 = vpop.f32.mrb[0].mxu0
        %v1902 = vadd.f32 %v1805, %v1901
        %v1903 = vpop.f32.mrb[0].mxu0
        %1904 = vmatprep.mubr.bf16.mxu0 %v1475
        %1905 = vmatmul.mubr.bf16.gmra.mrb[0].mxu0 %v1474
        %v1906 = vpop.f32.mrb[0].mxu0
        %v1907 = vadd.f32 %v1810, %v1906
        %v1908 = vpop.f32.mrb[0].mxu0
        %v1909 = vpop.f32.mrb[0].mxu0
        %v1910 = vadd.f32 %v1813, %v1909
        %v1911 = vpop.f32.mrb[0].mxu0
        %1912 = vmatprep.mubr.bf16.mxu0 %v1479
        %1913 = vmatmul.mubr.bf16.gmra.mrb[0].mxu0 %v1478
        %v1914 = vpop.f32.mrb[0].mxu0
        %v1915 = vadd.f32 %v1818, %v1914
        %v1916 = vpop.f32.mrb[0].mxu0
        %v1917 = vpop.f32.mrb[0].mxu0
        %v1918 = vadd.f32 %v1821, %v1917
        %v1919 = vpop.f32.mrb[0].mxu0
        %1920 = vmatprep.mubr.bf16.mxu0 %v1483
        %1921 = vmatmul.mubr.bf16.gmra.mrb[0].mxu0 %v1482
        %v1922 = vpop.f32.mrb[0].mxu0
        %v1923 = vadd.f32 %v1826, %v1922
        %v1924 = vpop.f32.mrb[0].mxu0
        %v1925 = vpop.f32.mrb[0].mxu0
        %v1926 = vadd.f32 %v1829, %v1925
        %v1927 = vpop.f32.mrb[0].mxu0
        %1928 = vmatprep.mubr.bf16.mxu0 %v1487
        %1929 = vmatmul.mubr.bf16.gmra.mrb[0].mxu0 %v1486
        %v1930 = vpop.f32.mrb[0].mxu0
        %v1931 = vadd.f32 %v1834, %v1930
        %v1932 = vpop.f32.mrb[0].mxu0
        %v1933 = vpop.f32.mrb[0].mxu0
        %v1934 = vadd.f32 %v1837, %v1933
        %v1935 = vpop.f32.mrb[0].mxu0
        %1936 = vmatprep.mubr.bf16.mxu0 %v1491
        %1937 = vmatmul.mubr.bf16.gmra.mrb[0].mxu0 %v1490
        %v1938 = vpop.f32.mrb[0].mxu0
        %v1939 = vadd.f32 %v1842, %v1938
        %v1940 = vpop.f32.mrb[0].mxu0
        %v1941 = vpop.f32.mrb[0].mxu0
        %v1942 = vadd.f32 %v1845, %v1941
        %v1943 = vpop.f32.mrb[0].mxu0
        %1944 = vmatprep.mubr.bf16.mxu0 %v1495
        %1945 = vmatmul.mubr.bf16.gmra.mrb[0].mxu0 %v1494
        %v1946 = vpop.f32.mrb[0].mxu0
        %v1947 = vadd.f32 %v1850, %v1946
        %v1948 = vpop.f32.mrb[0].mxu0
        %v1949 = vpop.f32.mrb[0].mxu0
        %v1950 = vadd.f32 %v1853, %v1949
        %v1951 = vpop.f32.mrb[0].mxu0
        %1952 = vdwg.mxu0
        %1953 = vst [vmem:[%s325] sm:$0xff] %v1891
        %1954 = vst [vmem:[%s325 + $0x8] sm:$0xff] %v1894
        %1955 = vst [vmem:[%s325 + $0x10] sm:$0xff] %v1899
        %1956 = vst [vmem:[%s325 + $0x18] sm:$0xff] %v1902
        %1957 = vst [vmem:[%s325 + $0x20] sm:$0xff] %v1907
        %1958 = vst [vmem:[%s325 + $0x28] sm:$0xff] %v1910
        %1959 = vst [vmem:[%s325 + $0x30] sm:$0xff] %v1915
        %1960 = vst [vmem:[%s325 + $0x38] sm:$0xff] %v1918
        %1961 = vst [vmem:[%s325 + $0x40] sm:$0xff] %v1923
        %1962 = vst [vmem:[%s325 + $0x48] sm:$0xff] %v1926
        %1963 = vst [vmem:[%s325 + $0x50] sm:$0xff] %v1931
        %1964 = vst [vmem:[%s325 + $0x58] sm:$0xff] %v1934
        %1965 = vst [vmem:[%s325 + $0x60] sm:$0xff] %v1939
        %1966 = vst [vmem:[%s325 + $0x68] sm:$0xff] %v1942
        %1967 = vst [vmem:[%s325 + $0x70] sm:$0xff] %v1947
        %1968 = vst [vmem:[%s325 + $0x78] sm:$0xff] %v1950
        %s1969 = sand.u32 %s185, 1
        %s1970 = scalar_lea.sflag [#allocation4], %s1969
        %s1971 = sand.u32 %s185, 1
        %s1972 = smul.addr %s1971, 128
        %s1973 = scalar_lea.vmem [#allocation8], %s1972
        // Predicated region
        $region61: #{tpu_custom_call.1} parent=47 // pred_check
          %p1974 = pneg %p195
        $region62: #{tpu_custom_call.1} parent=47 // pred_check_branch
          %1976 = sbr.rel (%p1974) target = $region64
        $region63: #{tpu_custom_call.1} parent=47 // pred_region
          %s1977 = smul.u32 16, %s25
          %s1979 = ssub.s32 2048, 2048
          %1980 = vsyncadd %s1970, %s1979
          %s1981 = smul.addr %s1977, 128
          %s1982 = scalar_lea.hbm %s7, %s1981
          %s1983 = sshll.u32 %s1973, 4
          %s1984 = int_to_ptr.vmem [resolvable:$true] %s1983
          %1989 = dma.vmem_to_hbm [thread:$0]  %s1984, 2048, %s1982, %s1970, 128, 128, 8
        $region64: #{tpu_custom_call.1} parent=47 // pred_fallthru
          _
      $region48: #{tpu_custom_call.1} parent=5 // pred_fallthru
        _
      %p1990 = scmp.le.s32.totalorder 2, %s20
      // Predicated region
      $region65: #{tpu_custom_call.1} parent=5 // pred_check
        %p1991 = pneg %p1990
      $region66: #{tpu_custom_call.1} parent=5 // pred_check_branch
        %1993 = sbr.rel (%p1991) target = $region68
      $region67: #{tpu_custom_call.1} parent=5 // pred_region
        %s1994 = ssub.s32 %s20, 2
        // Predicated region
        $region69: #{tpu_custom_call.1} parent=67 // pred_check
          %p1995 = pneg %p201
        $region70: #{tpu_custom_call.1} parent=67 // pred_check_branch
          %1997 = sbr.rel (%p1995) target = $region72
        $region71: #{tpu_custom_call.1} parent=67 // pred_region
          %s1998 = sand.u32 %s186, 1
          %s1999 = scalar_lea.sflag [#allocation4], %s1998
          %s2000 = sand.u32 %s186, 1
          %s2001 = smul.addr %s2000, 128
          %s2002 = scalar_lea.vmem [#allocation8], %s2001
          %2003 = dma.done %s1999, 2048
        $region72: #{tpu_custom_call.1} parent=67 // pred_fallthru
          _
      $region68: #{tpu_custom_call.1} parent=5 // pred_fallthru
        _
    $region6: #{tpu_custom_call.1} parent=1 // loop_footer
      %s24 = sadd.s32 1, %s20
    $region7: #{tpu_custom_call.1} parent=1 // loop_footer_branch
      %19 = sbr.rel target = $region3
    $region8: #{tpu_custom_call.1} parent=1 // loop_exit
      _
    %2004 = vsyncpa [#allocation3], 1
    %s2005 = scalar_lea.sflag [#allocation3], 1
    %2006 = vsyncpa %s2005, 1
    %2007 = vsyncpa [#allocation6], 1
    %2008 = vsyncpa [#allocation4], 1
    %s2009 = scalar_lea.sflag [#allocation4], 1
    %2010 = vsyncpa %s2009, 1

</llo_original>
